<compile_context>
chip_gen: v5e
topology: v5e:2x2
jax: 0.10.0
libtpu: 0.0.40
codegen_flags: <defaults>
</compile_context>

<pallas_src>
import math
import jax
import jax.numpy as jnp
from jax.experimental import pallas as pl
from jax.experimental.pallas import tpu as pltpu

# ----- model config (small, consistent with Block(dim, num_heads)) -----
B = 2            # batch
N = 8            # tokens
C = 32           # dim
H = 4            # num_heads
DH = C // H      # head_dim
HID = int(C * 4.0)   # mlp hidden
BN = B * N
SCALE = DH ** (-0.5)
EPS = 1e-5       # nn.LayerNorm default


def _layernorm(x, gamma, beta):
    mu = jnp.mean(x, axis=-1, keepdims=True)
    var = jnp.mean((x - mu) * (x - mu), axis=-1, keepdims=True)
    return (x - mu) * jax.lax.rsqrt(var + EPS) * gamma + beta


def _gelu_exact(x):
    # exact (erf) GELU, matching torch.nn.GELU default.
    # (tanh-approx GELU would move the transcendental onto the EUP, but changes
    #  numerics vs. the PyTorch module, so the exact form is kept.)
    return 0.5 * x * (1.0 + jax.lax.erf(x * (1.0 / math.sqrt(2.0))))


def block_kernel(x_ref, mask_ref, g1_ref, b1_ref,
                 wq_ref, wk_ref, wv_ref, wp_ref, bproj_ref,
                 g2_ref, b2_ref, w1_ref, bm1_ref, w2_ref, bm2_ref,
                 out_ref):
    x = x_ref[...]                                     # (BN, C) f32

    # ---- norm1 (f32 elementwise) ----
    xn = _layernorm(x, g1_ref[...], b1_ref[...])
    xn_b = xn.astype(jnp.bfloat16)                     # MXU operand

    # ---- attention ----
    # Per-head projections with pre-split (H, C, DH) weights (no in-kernel lane
    # slicing of a (.., 3C) qkv tensor, no lane concatenate). wq already carries
    # the attention scale.
    q_parts, k_parts, v_parts = [], [], []
    for h in range(H):                                 # static, fully unrolled
        q_parts.append(jnp.dot(xn_b, wq_ref[h], preferred_element_type=jnp.float32))
        k_parts.append(jnp.dot(xn_b, wk_ref[h], preferred_element_type=jnp.float32))
        v_parts.append(jnp.dot(xn_b, wv_ref[h], preferred_element_type=jnp.float32))
    qg = jnp.stack(q_parts, axis=0).astype(jnp.bfloat16)   # (H, BN, DH)
    kg = jnp.stack(k_parts, axis=0).astype(jnp.bfloat16)   # (H, BN, DH)
    vg = jnp.stack(v_parts, axis=0).astype(jnp.bfloat16)   # (H, BN, DH)

    # Single batched (pre-scaled) QK^T over the head dim; cross-batch pairs are
    # removed with the additive block-diagonal mask from the wrapper.
    s = jnp.einsum('hnd,hmd->hnm', qg, kg,
                   preferred_element_type=jnp.float32)      # (H, BN, BN) f32
    s = s + mask_ref[...]
    s = s - jnp.max(s, axis=-1, keepdims=True)
    e = jnp.exp(s)
    denom = jnp.sum(e, axis=-1, keepdims=True)
    p = e * pl.reciprocal(denom, approx=True)               # EUP reciprocal

    # Single batched PV contraction over the head dim.
    o = jnp.einsum('hnm,hmd->hnd', p.astype(jnp.bfloat16), vg,
                   preferred_element_type=jnp.float32)      # (H, BN, DH) f32

    # Output projection accumulated per head with pre-split (H, DH, C) weights:
    # equivalent to concat(heads) @ Wproj, but without the lane concat.
    y = bproj_ref[...] + sum(
        jnp.dot(o[h].astype(jnp.bfloat16), wp_ref[h],
                preferred_element_type=jnp.float32)
        for h in range(H))                                   # (BN, C) f32

    # ---- first residual ----
    x1 = x + y

    # ---- norm2 + MLP ----
    xn2 = _layernorm(x1, g2_ref[...], b2_ref[...])
    h1 = jnp.dot(xn2.astype(jnp.bfloat16), w1_ref[...],
                 preferred_element_type=jnp.float32) + bm1_ref[...]
    h1 = _gelu_exact(h1)                                     # f32 (BN, HID)
    h2 = jnp.dot(h1.astype(jnp.bfloat16), w2_ref[...],
                 preferred_element_type=jnp.float32) + bm2_ref[...]

    # ---- second residual ----
    out_ref[...] = x1 + h2


def block_forward(x, params):
    (g1, b1, wqkv, wproj, bproj, g2, b2, w1, bm1, w2, bm2) = params

    # -------- wrapper-side layout plumbing (free) --------
    x_flat = x.reshape(BN, C)
    # pre-split QKV weight per head: (H, C, DH); proj weight per head: (H, DH, C).
    # Attention scale folded into Wq (Q*scale @ K^T == (Q @ K^T)*scale).
    wq = (SCALE * wqkv[:, 0:C]).reshape(C, H, DH).transpose(1, 0, 2).astype(jnp.bfloat16)
    wk = wqkv[:, C:2 * C].reshape(C, H, DH).transpose(1, 0, 2).astype(jnp.bfloat16)
    wv = wqkv[:, 2 * C:3 * C].reshape(C, H, DH).transpose(1, 0, 2).astype(jnp.bfloat16)
    wp = wproj.reshape(H, DH, C).astype(jnp.bfloat16)
    w1b = w1.astype(jnp.bfloat16)
    w2b = w2.astype(jnp.bfloat16)
    # block-diagonal additive mask: token i may only attend tokens of same batch
    tok_batch = jnp.arange(BN, dtype=jnp.int32) // N
    attn_mask = jnp.where(tok_batch[:, None] == tok_batch[None, :],
                          jnp.float32(0.0), jnp.float32(-1e30))

    def full(shape):
        return pl.BlockSpec(shape, lambda i: (0,) * len(shape))

    flops = (3 * H * 2 * BN * C * DH          # QKV
             + 2 * 2 * H * BN * BN * DH       # QK^T + PV
             + H * 2 * BN * DH * C            # proj
             + 2 * 2 * BN * C * HID)          # fc1 + fc2
    cost = pl.CostEstimate(
        flops=flops,
        transcendentals=H * BN * BN + BN * HID + 4 * BN,
        bytes_accessed=2 * 4 * BN * C + 4 * BN * BN
        + 2 * (4 * C * C + 2 * C * HID) + 4 * (6 * C + HID))

    out = pl.pallas_call(
        block_kernel,
        out_shape=jax.ShapeDtypeStruct((BN, C), jnp.float32),
        grid=(1,),                               # single step: all data fits VMEM
        in_specs=[
            full((BN, C)),                       # x (flattened tokens)
            full((BN, BN)),                      # attention mask
            full((1, C)), full((1, C)),          # norm1 gamma/beta
            full((H, C, DH)), full((H, C, DH)), full((H, C, DH)),   # Wq/Wk/Wv
            full((H, DH, C)), full((1, C)),      # proj weight / bias
            full((1, C)), full((1, C)),          # norm2 gamma/beta
            full((C, HID)), full((1, HID)),      # fc1 weight / bias
            full((HID, C)), full((1, C)),        # fc2 weight / bias
        ],
        out_specs=full((BN, C)),
        compiler_params=pltpu.CompilerParams(
            dimension_semantics=("arbitrary",)),
        cost_estimate=cost,
    )(x_flat, attn_mask, g1, b1, wq, wk, wv, wp, bproj,
      g2, b2, w1b, bm1, w2b, bm2)
    return out.reshape(B, N, C)


def block_reference(x, params):
    """Plain-JAX f32 reference for correctness check."""
    (g1, b1, wqkv, wproj, bproj, g2, b2, w1, bm1, w2, bm2) = params
    xn = _layernorm(x, g1[0], b1[0])
    qkv = xn @ wqkv                                  # (B, N, 3C)
    q, k, v = qkv[..., :C], qkv[..., C:2 * C], qkv[..., 2 * C:]
    qh = q.reshape(B, N, H, DH).transpose(0, 2, 1, 3)
    kh = k.reshape(B, N, H, DH).transpose(0, 2, 1, 3)
    vh = v.reshape(B, N, H, DH).transpose(0, 2, 1, 3)
    a = jnp.einsum('bhnd,bhmd->bhnm', qh, kh) * SCALE
    a = jax.nn.softmax(a, axis=-1)
    o = jnp.einsum('bhnm,bhmd->bhnd', a, vh).transpose(0, 2, 1, 3).reshape(B, N, C)
    y = o @ wproj + bproj[0]
    x1 = x + y
    xn2 = _layernorm(x1, g2[0], b2[0])
    h = _gelu_exact(xn2 @ w1 + bm1[0])
    return x1 + (h @ w2 + bm2[0])


def make_params(key):
    ks = jax.random.split(key, 8)
    s = 0.02
    g1 = jnp.ones((1, C), jnp.float32)
    b1 = jnp.zeros((1, C), jnp.float32)
    wqkv = (s * jax.random.normal(ks[0], (C, 3 * C))).astype(jnp.float32)
    wproj = (s * jax.random.normal(ks[1], (C, C))).astype(jnp.float32)
    bproj = (s * jax.random.normal(ks[2], (1, C))).astype(jnp.float32)
    g2 = jnp.ones((1, C), jnp.float32)
    b2 = jnp.zeros((1, C), jnp.float32)
    w1 = (s * jax.random.normal(ks[3], (C, HID))).astype(jnp.float32)
    bm1 = (s * jax.random.normal(ks[4], (1, HID))).astype(jnp.float32)
    w2 = (s * jax.random.normal(ks[5], (HID, C))).astype(jnp.float32)
    bm2 = (s * jax.random.normal(ks[6], (1, C))).astype(jnp.float32)
    return (g1, b1, wqkv, wproj, bproj, g2, b2, w1, bm1, w2, bm2)


if __name__ == "__main__":
    key = jax.random.PRNGKey(0)
    kx, kp = jax.random.split(key)
    x = jax.random.normal(kx, (B, N, C), dtype=jnp.float32)
    params = make_params(kp)

    out = block_forward(x, params)
    out = jax.block_until_ready(out)

    ref = block_reference(x, params)
    assert out.shape == (B, N, C)
    # bf16 MXU operands + approx reciprocal => loosened tolerance vs f32 ref.
    assert jnp.allclose(out, ref, atol=1e-2, rtol=1e-2), \
        float(jnp.max(jnp.abs(out - ref)))

    # TODO(synk): Spatial_Weighting (torch.lobpcg generalized eigensolver, only
    # used when return_spatial_map=True) and the patch-embed / temporal-embed
    # plumbing of VisionTransformer.forward have no clean Pallas equivalent /
    # are host-side layout work; the Pallas kernel covers the repeated Block
    # (LN -> MHSA -> residual -> LN -> MLP -> residual) compute.
    print("KERNEL_OK")
</pallas_src>

<mosaic_0001>
module attributes {stable_mosaic.version = 11 : i64} {
  func.func @block_kernel(%arg0: i32, %arg1: memref<16x32xf32, #tpu.memory_space<vmem>>, %arg2: memref<16x16xf32, #tpu.memory_space<vmem>>, %arg3: memref<1x32xf32, #tpu.memory_space<vmem>>, %arg4: memref<1x32xf32, #tpu.memory_space<vmem>>, %arg5: memref<4x32x8xbf16, #tpu.memory_space<vmem>>, %arg6: memref<4x32x8xbf16, #tpu.memory_space<vmem>>, %arg7: memref<4x32x8xbf16, #tpu.memory_space<vmem>>, %arg8: memref<4x8x32xbf16, #tpu.memory_space<vmem>>, %arg9: memref<1x32xf32, #tpu.memory_space<vmem>>, %arg10: memref<1x32xf32, #tpu.memory_space<vmem>>, %arg11: memref<1x32xf32, #tpu.memory_space<vmem>>, %arg12: memref<32x128xbf16, #tpu.memory_space<vmem>>, %arg13: memref<1x128xf32, #tpu.memory_space<vmem>>, %arg14: memref<128x32xbf16, #tpu.memory_space<vmem>>, %arg15: memref<1x32xf32, #tpu.memory_space<vmem>>, %arg16: memref<16x32xf32, #tpu.memory_space<vmem>>) attributes {dimension_semantics = [#tpu.dimension_semantics<arbitrary>], iteration_bounds = array<i64: 1>, scalar_prefetch = 0 : i64, scratch_operands = 0 : i64, tpu.core_type = #tpu.core_type<tc>, window_params = [{pipeline_mode = #tpu.pipeline_mode<synchronous>, transform_indices = @transform_0, window_bounds = array<i64: 16, 32>}, {pipeline_mode = #tpu.pipeline_mode<synchronous>, transform_indices = @transform_1, window_bounds = array<i64: 16, 16>}, {pipeline_mode = #tpu.pipeline_mode<synchronous>, transform_indices = @transform_2, window_bounds = array<i64: 1, 32>}, {pipeline_mode = #tpu.pipeline_mode<synchronous>, transform_indices = @transform_3, window_bounds = array<i64: 1, 32>}, {pipeline_mode = #tpu.pipeline_mode<synchronous>, transform_indices = @transform_4, window_bounds = array<i64: 4, 32, 8>}, {pipeline_mode = #tpu.pipeline_mode<synchronous>, transform_indices = @transform_5, window_bounds = array<i64: 4, 32, 8>}, {pipeline_mode = #tpu.pipeline_mode<synchronous>, transform_indices = @transform_6, window_bounds = array<i64: 4, 32, 8>}, {pipeline_mode = #tpu.pipeline_mode<synchronous>, transform_indices = @transform_7, window_bounds = array<i64: 4, 8, 32>}, {pipeline_mode = #tpu.pipeline_mode<synchronous>, transform_indices = @transform_8, window_bounds = array<i64: 1, 32>}, {pipeline_mode = #tpu.pipeline_mode<synchronous>, transform_indices = @transform_9, window_bounds = array<i64: 1, 32>}, {pipeline_mode = #tpu.pipeline_mode<synchronous>, transform_indices = @transform_10, window_bounds = array<i64: 1, 32>}, {pipeline_mode = #tpu.pipeline_mode<synchronous>, transform_indices = @transform_11, window_bounds = array<i64: 32, 128>}, {pipeline_mode = #tpu.pipeline_mode<synchronous>, transform_indices = @transform_12, window_bounds = array<i64: 1, 128>}, {pipeline_mode = #tpu.pipeline_mode<synchronous>, transform_indices = @transform_13, window_bounds = array<i64: 128, 32>}, {pipeline_mode = #tpu.pipeline_mode<synchronous>, transform_indices = @transform_14, window_bounds = array<i64: 1, 32>}, {pipeline_mode = #tpu.pipeline_mode<synchronous>, transform_indices = @transform_15, window_bounds = array<i64: 16, 32>}]} {
    %c0 = arith.constant 0 : index
    %c0_0 = arith.constant 0 : index
    %0 = vector.load %arg1[%c0, %c0_0] : memref<16x32xf32, #tpu.memory_space<vmem>>, vector<16x32xf32>
    %c0_1 = arith.constant 0 : index
    %c0_2 = arith.constant 0 : index
    %1 = vector.load %arg3[%c0_1, %c0_2] : memref<1x32xf32, #tpu.memory_space<vmem>>, vector<1x32xf32>
    %c0_3 = arith.constant 0 : index
    %c0_4 = arith.constant 0 : index
    %2 = vector.load %arg4[%c0_3, %c0_4] : memref<1x32xf32, #tpu.memory_space<vmem>>, vector<1x32xf32>
    %cst = arith.constant dense<0.000000e+00> : vector<16xf32>
    %3 = vector.multi_reduction <add>, %0, %cst [1] : vector<16x32xf32> to vector<16xf32>
    %4 = vector.shape_cast %3 : vector<16xf32> to vector<16x1xf32>
    %cst_5 = arith.constant 3.200000e+01 : f32
    %5 = vector.broadcast %cst_5 : f32 to vector<16x1xf32>
    %6 = arith.divf %4, %5 : vector<16x1xf32>
    %7 = vector.broadcast %6 : vector<16x1xf32> to vector<16x32xf32>
    %8 = arith.subf %0, %7 : vector<16x32xf32>
    %9 = vector.broadcast %6 : vector<16x1xf32> to vector<16x32xf32>
    %10 = arith.subf %0, %9 : vector<16x32xf32>
    %11 = arith.mulf %8, %10 : vector<16x32xf32>
    %cst_6 = arith.constant dense<0.000000e+00> : vector<16xf32>
    %12 = vector.multi_reduction <add>, %11, %cst_6 [1] : vector<16x32xf32> to vector<16xf32>
    %13 = vector.shape_cast %12 : vector<16xf32> to vector<16x1xf32>
    %cst_7 = arith.constant 3.200000e+01 : f32
    %14 = vector.broadcast %cst_7 : f32 to vector<16x1xf32>
    %15 = arith.divf %13, %14 : vector<16x1xf32>
    %16 = vector.broadcast %6 : vector<16x1xf32> to vector<16x32xf32>
    %17 = arith.subf %0, %16 : vector<16x32xf32>
    %cst_8 = arith.constant 9.99999974E-6 : f32
    %18 = vector.broadcast %cst_8 : f32 to vector<16x1xf32>
    %19 = arith.addf %15, %18 : vector<16x1xf32>
    %20 = math.rsqrt %19 : vector<16x1xf32>
    %21 = vector.broadcast %20 : vector<16x1xf32> to vector<16x32xf32>
    %22 = arith.mulf %17, %21 : vector<16x32xf32>
    %23 = vector.broadcast %1 : vector<1x32xf32> to vector<16x32xf32>
    %24 = arith.mulf %22, %23 : vector<16x32xf32>
    %25 = vector.broadcast %2 : vector<1x32xf32> to vector<16x32xf32>
    %26 = arith.addf %24, %25 : vector<16x32xf32>
    %27 = arith.truncf %26 : vector<16x32xf32> to vector<16x32xbf16>
    %c0_9 = arith.constant 0 : index
    %c0_10 = arith.constant 0 : index
    %c0_11 = arith.constant 0 : index
    %28 = vector.load %arg5[%c0_9, %c0_10, %c0_11] : memref<4x32x8xbf16, #tpu.memory_space<vmem>>, vector<1x32x8xbf16>
    %29 = vector.shape_cast %28 : vector<1x32x8xbf16> to vector<32x8xbf16>
    %cst_12 = arith.constant dense<0.000000e+00> : vector<16x8xf32>
    %30 = tpu.matmul %27, %29, %cst_12 {dimension_numbers = #tpu.dot_dimension_numbers<[1], [0], [0], [1], [0, 0, 1, 1], [], []>} : vector<16x32xbf16>, vector<32x8xbf16>, vector<16x8xf32> -> vector<16x8xf32>
    %c0_13 = arith.constant 0 : index
    %c0_14 = arith.constant 0 : index
    %c0_15 = arith.constant 0 : index
    %31 = vector.load %arg6[%c0_13, %c0_14, %c0_15] : memref<4x32x8xbf16, #tpu.memory_space<vmem>>, vector<1x32x8xbf16>
    %32 = vector.shape_cast %31 : vector<1x32x8xbf16> to vector<32x8xbf16>
    %cst_16 = arith.constant dense<0.000000e+00> : vector<16x8xf32>
    %33 = tpu.matmul %27, %32, %cst_16 {dimension_numbers = #tpu.dot_dimension_numbers<[1], [0], [0], [1], [0, 0, 1, 1], [], []>} : vector<16x32xbf16>, vector<32x8xbf16>, vector<16x8xf32> -> vector<16x8xf32>
    %c0_17 = arith.constant 0 : index
    %c0_18 = arith.constant 0 : index
    %c0_19 = arith.constant 0 : index
    %34 = vector.load %arg7[%c0_17, %c0_18, %c0_19] : memref<4x32x8xbf16, #tpu.memory_space<vmem>>, vector<1x32x8xbf16>
    %35 = vector.shape_cast %34 : vector<1x32x8xbf16> to vector<32x8xbf16>
    %cst_20 = arith.constant dense<0.000000e+00> : vector<16x8xf32>
    %36 = tpu.matmul %27, %35, %cst_20 {dimension_numbers = #tpu.dot_dimension_numbers<[1], [0], [0], [1], [0, 0, 1, 1], [], []>} : vector<16x32xbf16>, vector<32x8xbf16>, vector<16x8xf32> -> vector<16x8xf32>
    %c1 = arith.constant 1 : index
    %c0_21 = arith.constant 0 : index
    %c0_22 = arith.constant 0 : index
    %37 = vector.load %arg5[%c1, %c0_21, %c0_22] : memref<4x32x8xbf16, #tpu.memory_space<vmem>>, vector<1x32x8xbf16>
    %38 = vector.shape_cast %37 : vector<1x32x8xbf16> to vector<32x8xbf16>
    %cst_23 = arith.constant dense<0.000000e+00> : vector<16x8xf32>
    %39 = tpu.matmul %27, %38, %cst_23 {dimension_numbers = #tpu.dot_dimension_numbers<[1], [0], [0], [1], [0, 0, 1, 1], [], []>} : vector<16x32xbf16>, vector<32x8xbf16>, vector<16x8xf32> -> vector<16x8xf32>
    %c1_24 = arith.constant 1 : index
    %c0_25 = arith.constant 0 : index
    %c0_26 = arith.constant 0 : index
    %40 = vector.load %arg6[%c1_24, %c0_25, %c0_26] : memref<4x32x8xbf16, #tpu.memory_space<vmem>>, vector<1x32x8xbf16>
    %41 = vector.shape_cast %40 : vector<1x32x8xbf16> to vector<32x8xbf16>
    %cst_27 = arith.constant dense<0.000000e+00> : vector<16x8xf32>
    %42 = tpu.matmul %27, %41, %cst_27 {dimension_numbers = #tpu.dot_dimension_numbers<[1], [0], [0], [1], [0, 0, 1, 1], [], []>} : vector<16x32xbf16>, vector<32x8xbf16>, vector<16x8xf32> -> vector<16x8xf32>
    %c1_28 = arith.constant 1 : index
    %c0_29 = arith.constant 0 : index
    %c0_30 = arith.constant 0 : index
    %43 = vector.load %arg7[%c1_28, %c0_29, %c0_30] : memref<4x32x8xbf16, #tpu.memory_space<vmem>>, vector<1x32x8xbf16>
    %44 = vector.shape_cast %43 : vector<1x32x8xbf16> to vector<32x8xbf16>
    %cst_31 = arith.constant dense<0.000000e+00> : vector<16x8xf32>
    %45 = tpu.matmul %27, %44, %cst_31 {dimension_numbers = #tpu.dot_dimension_numbers<[1], [0], [0], [1], [0, 0, 1, 1], [], []>} : vector<16x32xbf16>, vector<32x8xbf16>, vector<16x8xf32> -> vector<16x8xf32>
    %c2 = arith.constant 2 : index
    %c0_32 = arith.constant 0 : index
    %c0_33 = arith.constant 0 : index
    %46 = vector.load %arg5[%c2, %c0_32, %c0_33] : memref<4x32x8xbf16, #tpu.memory_space<vmem>>, vector<1x32x8xbf16>
    %47 = vector.shape_cast %46 : vector<1x32x8xbf16> to vector<32x8xbf16>
    %cst_34 = arith.constant dense<0.000000e+00> : vector<16x8xf32>
    %48 = tpu.matmul %27, %47, %cst_34 {dimension_numbers = #tpu.dot_dimension_numbers<[1], [0], [0], [1], [0, 0, 1, 1], [], []>} : vector<16x32xbf16>, vector<32x8xbf16>, vector<16x8xf32> -> vector<16x8xf32>
    %c2_35 = arith.constant 2 : index
    %c0_36 = arith.constant 0 : index
    %c0_37 = arith.constant 0 : index
    %49 = vector.load %arg6[%c2_35, %c0_36, %c0_37] : memref<4x32x8xbf16, #tpu.memory_space<vmem>>, vector<1x32x8xbf16>
    %50 = vector.shape_cast %49 : vector<1x32x8xbf16> to vector<32x8xbf16>
    %cst_38 = arith.constant dense<0.000000e+00> : vector<16x8xf32>
    %51 = tpu.matmul %27, %50, %cst_38 {dimension_numbers = #tpu.dot_dimension_numbers<[1], [0], [0], [1], [0, 0, 1, 1], [], []>} : vector<16x32xbf16>, vector<32x8xbf16>, vector<16x8xf32> -> vector<16x8xf32>
    %c2_39 = arith.constant 2 : index
    %c0_40 = arith.constant 0 : index
    %c0_41 = arith.constant 0 : index
    %52 = vector.load %arg7[%c2_39, %c0_40, %c0_41] : memref<4x32x8xbf16, #tpu.memory_space<vmem>>, vector<1x32x8xbf16>
    %53 = vector.shape_cast %52 : vector<1x32x8xbf16> to vector<32x8xbf16>
    %cst_42 = arith.constant dense<0.000000e+00> : vector<16x8xf32>
    %54 = tpu.matmul %27, %53, %cst_42 {dimension_numbers = #tpu.dot_dimension_numbers<[1], [0], [0], [1], [0, 0, 1, 1], [], []>} : vector<16x32xbf16>, vector<32x8xbf16>, vector<16x8xf32> -> vector<16x8xf32>
    %c3 = arith.constant 3 : index
    %c0_43 = arith.constant 0 : index
    %c0_44 = arith.constant 0 : index
    %55 = vector.load %arg5[%c3, %c0_43, %c0_44] : memref<4x32x8xbf16, #tpu.memory_space<vmem>>, vector<1x32x8xbf16>
    %56 = vector.shape_cast %55 : vector<1x32x8xbf16> to vector<32x8xbf16>
    %cst_45 = arith.constant dense<0.000000e+00> : vector<16x8xf32>
    %57 = tpu.matmul %27, %56, %cst_45 {dimension_numbers = #tpu.dot_dimension_numbers<[1], [0], [0], [1], [0, 0, 1, 1], [], []>} : vector<16x32xbf16>, vector<32x8xbf16>, vector<16x8xf32> -> vector<16x8xf32>
    %c3_46 = arith.constant 3 : index
    %c0_47 = arith.constant 0 : index
    %c0_48 = arith.constant 0 : index
    %58 = vector.load %arg6[%c3_46, %c0_47, %c0_48] : memref<4x32x8xbf16, #tpu.memory_space<vmem>>, vector<1x32x8xbf16>
    %59 = vector.shape_cast %58 : vector<1x32x8xbf16> to vector<32x8xbf16>
    %cst_49 = arith.constant dense<0.000000e+00> : vector<16x8xf32>
    %60 = tpu.matmul %27, %59, %cst_49 {dimension_numbers = #tpu.dot_dimension_numbers<[1], [0], [0], [1], [0, 0, 1, 1], [], []>} : vector<16x32xbf16>, vector<32x8xbf16>, vector<16x8xf32> -> vector<16x8xf32>
    %c3_50 = arith.constant 3 : index
    %c0_51 = arith.constant 0 : index
    %c0_52 = arith.constant 0 : index
    %61 = vector.load %arg7[%c3_50, %c0_51, %c0_52] : memref<4x32x8xbf16, #tpu.memory_space<vmem>>, vector<1x32x8xbf16>
    %62 = vector.shape_cast %61 : vector<1x32x8xbf16> to vector<32x8xbf16>
    %cst_53 = arith.constant dense<0.000000e+00> : vector<16x8xf32>
    %63 = tpu.matmul %27, %62, %cst_53 {dimension_numbers = #tpu.dot_dimension_numbers<[1], [0], [0], [1], [0, 0, 1, 1], [], []>} : vector<16x32xbf16>, vector<32x8xbf16>, vector<16x8xf32> -> vector<16x8xf32>
    %64 = vector.shape_cast %30 : vector<16x8xf32> to vector<1x16x8xf32>
    %65 = vector.shape_cast %39 : vector<16x8xf32> to vector<1x16x8xf32>
    %66 = vector.shape_cast %48 : vector<16x8xf32> to vector<1x16x8xf32>
    %67 = vector.shape_cast %57 : vector<16x8xf32> to vector<1x16x8xf32>
    %68 = tpu.concatenate %64, %65, %66, %67 in 0 : vector<1x16x8xf32>, vector<1x16x8xf32>, vector<1x16x8xf32>, vector<1x16x8xf32> -> vector<4x16x8xf32>
    %69 = arith.truncf %68 : vector<4x16x8xf32> to vector<4x16x8xbf16>
    %70 = vector.shape_cast %33 : vector<16x8xf32> to vector<1x16x8xf32>
    %71 = vector.shape_cast %42 : vector<16x8xf32> to vector<1x16x8xf32>
    %72 = vector.shape_cast %51 : vector<16x8xf32> to vector<1x16x8xf32>
    %73 = vector.shape_cast %60 : vector<16x8xf32> to vector<1x16x8xf32>
    %74 = tpu.concatenate %70, %71, %72, %73 in 0 : vector<1x16x8xf32>, vector<1x16x8xf32>, vector<1x16x8xf32>, vector<1x16x8xf32> -> vector<4x16x8xf32>
    %75 = arith.truncf %74 : vector<4x16x8xf32> to vector<4x16x8xbf16>
    %76 = vector.shape_cast %36 : vector<16x8xf32> to vector<1x16x8xf32>
    %77 = vector.shape_cast %45 : vector<16x8xf32> to vector<1x16x8xf32>
    %78 = vector.shape_cast %54 : vector<16x8xf32> to vector<1x16x8xf32>
    %79 = vector.shape_cast %63 : vector<16x8xf32> to vector<1x16x8xf32>
    %80 = tpu.concatenate %76, %77, %78, %79 in 0 : vector<1x16x8xf32>, vector<1x16x8xf32>, vector<1x16x8xf32>, vector<1x16x8xf32> -> vector<4x16x8xf32>
    %81 = arith.truncf %80 : vector<4x16x8xf32> to vector<4x16x8xbf16>
    "tpu.trace_start"() <{level = 10 : i32, message = "hnd,hmd->hnm"}> : () -> ()
    %cst_54 = arith.constant dense<0.000000e+00> : vector<4x16x16xf32>
    %82 = tpu.matmul %69, %75, %cst_54 {dimension_numbers = #tpu.dot_dimension_numbers<[2], [2], [1], [1], [0, 0, 0, 1, 1, 1], [0], [0]>} : vector<4x16x8xbf16>, vector<4x16x8xbf16>, vector<4x16x16xf32> -> vector<4x16x16xf32>
    "tpu.trace_stop"() : () -> ()
    %c0_55 = arith.constant 0 : index
    %c0_56 = arith.constant 0 : index
    %83 = vector.load %arg2[%c0_55, %c0_56] : memref<16x16xf32, #tpu.memory_space<vmem>>, vector<16x16xf32>
    %84 = vector.shape_cast %83 : vector<16x16xf32> to vector<1x16x16xf32>
    %85 = vector.broadcast %84 : vector<1x16x16xf32> to vector<4x16x16xf32>
    %86 = arith.addf %82, %85 : vector<4x16x16xf32>
    %cst_57 = arith.constant dense<0xFF800000> : vector<4x16xf32>
    %87 = vector.multi_reduction <maximumf>, %86, %cst_57 [2] : vector<4x16x16xf32> to vector<4x16xf32>
    %88 = vector.shape_cast %87 : vector<4x16xf32> to vector<4x16x1xf32>
    %89 = vector.broadcast %88 : vector<4x16x1xf32> to vector<4x16x16xf32>
    %90 = arith.subf %86, %89 : vector<4x16x16xf32>
    %91 = math.exp %90 : vector<4x16x16xf32>
    %cst_58 = arith.constant dense<0.000000e+00> : vector<4x16xf32>
    %92 = vector.multi_reduction <add>, %91, %cst_58 [2] : vector<4x16x16xf32> to vector<4x16xf32>
    %93 = vector.shape_cast %92 : vector<4x16xf32> to vector<4x16x1xf32>
    %94 = tpu.reciprocal %93 {approx = true} : vector<4x16x1xf32> -> vector<4x16x1xf32>
    %95 = vector.broadcast %94 : vector<4x16x1xf32> to vector<4x16x16xf32>
    %96 = arith.mulf %91, %95 : vector<4x16x16xf32>
    %97 = arith.truncf %96 : vector<4x16x16xf32> to vector<4x16x16xbf16>
    "tpu.trace_start"() <{level = 10 : i32, message = "hnm,hmd->hnd"}> : () -> ()
    %cst_59 = arith.constant dense<0.000000e+00> : vector<4x16x8xf32>
    %98 = tpu.matmul %97, %81, %cst_59 {dimension_numbers = #tpu.dot_dimension_numbers<[2], [1], [1], [2], [0, 0, 0, 1, 1, 2], [0], [0]>} : vector<4x16x16xbf16>, vector<4x16x8xbf16>, vector<4x16x8xf32> -> vector<4x16x8xf32>
    "tpu.trace_stop"() : () -> ()
    %c0_60 = arith.constant 0 : index
    %c0_61 = arith.constant 0 : index
    %99 = vector.load %arg9[%c0_60, %c0_61] : memref<1x32xf32, #tpu.memory_space<vmem>>, vector<1x32xf32>
    %100 = vector.extract_strided_slice %98 {offsets = [0, 0, 0], sizes = [1, 16, 8], strides = [1, 1, 1]} : vector<4x16x8xf32> to vector<1x16x8xf32>
    %101 = vector.shape_cast %100 : vector<1x16x8xf32> to vector<16x8xf32>
    %102 = arith.truncf %101 : vector<16x8xf32> to vector<16x8xbf16>
    %c0_62 = arith.constant 0 : index
    %c0_63 = arith.constant 0 : index
    %c0_64 = arith.constant 0 : index
    %103 = vector.load %arg8[%c0_62, %c0_63, %c0_64] : memref<4x8x32xbf16, #tpu.memory_space<vmem>>, vector<1x8x32xbf16>
    %104 = vector.shape_cast %103 : vector<1x8x32xbf16> to vector<8x32xbf16>
    %cst_65 = arith.constant dense<0.000000e+00> : vector<16x32xf32>
    %105 = tpu.matmul %102, %104, %cst_65 {dimension_numbers = #tpu.dot_dimension_numbers<[1], [0], [0], [1], [0, 0, 1, 1], [], []>} : vector<16x8xbf16>, vector<8x32xbf16>, vector<16x32xf32> -> vector<16x32xf32>
    %cst_66 = arith.constant 0.000000e+00 : f32
    %106 = vector.broadcast %cst_66 : f32 to vector<16x32xf32>
    %107 = arith.addf %106, %105 : vector<16x32xf32>
    %108 = vector.extract_strided_slice %98 {offsets = [1, 0, 0], sizes = [1, 16, 8], strides = [1, 1, 1]} : vector<4x16x8xf32> to vector<1x16x8xf32>
    %109 = vector.shape_cast %108 : vector<1x16x8xf32> to vector<16x8xf32>
    %110 = arith.truncf %109 : vector<16x8xf32> to vector<16x8xbf16>
    %c1_67 = arith.constant 1 : index
    %c0_68 = arith.constant 0 : index
    %c0_69 = arith.constant 0 : index
    %111 = vector.load %arg8[%c1_67, %c0_68, %c0_69] : memref<4x8x32xbf16, #tpu.memory_space<vmem>>, vector<1x8x32xbf16>
    %112 = vector.shape_cast %111 : vector<1x8x32xbf16> to vector<8x32xbf16>
    %cst_70 = arith.constant dense<0.000000e+00> : vector<16x32xf32>
    %113 = tpu.matmul %110, %112, %cst_70 {dimension_numbers = #tpu.dot_dimension_numbers<[1], [0], [0], [1], [0, 0, 1, 1], [], []>} : vector<16x8xbf16>, vector<8x32xbf16>, vector<16x32xf32> -> vector<16x32xf32>
    %114 = arith.addf %107, %113 : vector<16x32xf32>
    %115 = vector.extract_strided_slice %98 {offsets = [2, 0, 0], sizes = [1, 16, 8], strides = [1, 1, 1]} : vector<4x16x8xf32> to vector<1x16x8xf32>
    %116 = vector.shape_cast %115 : vector<1x16x8xf32> to vector<16x8xf32>
    %117 = arith.truncf %116 : vector<16x8xf32> to vector<16x8xbf16>
    %c2_71 = arith.constant 2 : index
    %c0_72 = arith.constant 0 : index
    %c0_73 = arith.constant 0 : index
    %118 = vector.load %arg8[%c2_71, %c0_72, %c0_73] : memref<4x8x32xbf16, #tpu.memory_space<vmem>>, vector<1x8x32xbf16>
    %119 = vector.shape_cast %118 : vector<1x8x32xbf16> to vector<8x32xbf16>
    %cst_74 = arith.constant dense<0.000000e+00> : vector<16x32xf32>
    %120 = tpu.matmul %117, %119, %cst_74 {dimension_numbers = #tpu.dot_dimension_numbers<[1], [0], [0], [1], [0, 0, 1, 1], [], []>} : vector<16x8xbf16>, vector<8x32xbf16>, vector<16x32xf32> -> vector<16x32xf32>
    %121 = arith.addf %114, %120 : vector<16x32xf32>
    %122 = vector.extract_strided_slice %98 {offsets = [3, 0, 0], sizes = [1, 16, 8], strides = [1, 1, 1]} : vector<4x16x8xf32> to vector<1x16x8xf32>
    %123 = vector.shape_cast %122 : vector<1x16x8xf32> to vector<16x8xf32>
    %124 = arith.truncf %123 : vector<16x8xf32> to vector<16x8xbf16>
    %c3_75 = arith.constant 3 : index
    %c0_76 = arith.constant 0 : index
    %c0_77 = arith.constant 0 : index
    %125 = vector.load %arg8[%c3_75, %c0_76, %c0_77] : memref<4x8x32xbf16, #tpu.memory_space<vmem>>, vector<1x8x32xbf16>
    %126 = vector.shape_cast %125 : vector<1x8x32xbf16> to vector<8x32xbf16>
    %cst_78 = arith.constant dense<0.000000e+00> : vector<16x32xf32>
    %127 = tpu.matmul %124, %126, %cst_78 {dimension_numbers = #tpu.dot_dimension_numbers<[1], [0], [0], [1], [0, 0, 1, 1], [], []>} : vector<16x8xbf16>, vector<8x32xbf16>, vector<16x32xf32> -> vector<16x32xf32>
    %128 = arith.addf %121, %127 : vector<16x32xf32>
    %129 = vector.broadcast %99 : vector<1x32xf32> to vector<16x32xf32>
    %130 = arith.addf %129, %128 : vector<16x32xf32>
    %131 = arith.addf %0, %130 : vector<16x32xf32>
    %c0_79 = arith.constant 0 : index
    %c0_80 = arith.constant 0 : index
    %132 = vector.load %arg10[%c0_79, %c0_80] : memref<1x32xf32, #tpu.memory_space<vmem>>, vector<1x32xf32>
    %c0_81 = arith.constant 0 : index
    %c0_82 = arith.constant 0 : index
    %133 = vector.load %arg11[%c0_81, %c0_82] : memref<1x32xf32, #tpu.memory_space<vmem>>, vector<1x32xf32>
    %cst_83 = arith.constant dense<0.000000e+00> : vector<16xf32>
    %134 = vector.multi_reduction <add>, %131, %cst_83 [1] : vector<16x32xf32> to vector<16xf32>
    %135 = vector.shape_cast %134 : vector<16xf32> to vector<16x1xf32>
    %cst_84 = arith.constant 3.200000e+01 : f32
    %136 = vector.broadcast %cst_84 : f32 to vector<16x1xf32>
    %137 = arith.divf %135, %136 : vector<16x1xf32>
    %138 = vector.broadcast %137 : vector<16x1xf32> to vector<16x32xf32>
    %139 = arith.subf %131, %138 : vector<16x32xf32>
    %140 = vector.broadcast %137 : vector<16x1xf32> to vector<16x32xf32>
    %141 = arith.subf %131, %140 : vector<16x32xf32>
    %142 = arith.mulf %139, %141 : vector<16x32xf32>
    %cst_85 = arith.constant dense<0.000000e+00> : vector<16xf32>
    %143 = vector.multi_reduction <add>, %142, %cst_85 [1] : vector<16x32xf32> to vector<16xf32>
    %144 = vector.shape_cast %143 : vector<16xf32> to vector<16x1xf32>
    %cst_86 = arith.constant 3.200000e+01 : f32
    %145 = vector.broadcast %cst_86 : f32 to vector<16x1xf32>
    %146 = arith.divf %144, %145 : vector<16x1xf32>
    %147 = vector.broadcast %137 : vector<16x1xf32> to vector<16x32xf32>
    %148 = arith.subf %131, %147 : vector<16x32xf32>
    %cst_87 = arith.constant 9.99999974E-6 : f32
    %149 = vector.broadcast %cst_87 : f32 to vector<16x1xf32>
    %150 = arith.addf %146, %149 : vector<16x1xf32>
    %151 = math.rsqrt %150 : vector<16x1xf32>
    %152 = vector.broadcast %151 : vector<16x1xf32> to vector<16x32xf32>
    %153 = arith.mulf %148, %152 : vector<16x32xf32>
    %154 = vector.broadcast %132 : vector<1x32xf32> to vector<16x32xf32>
    %155 = arith.mulf %153, %154 : vector<16x32xf32>
    %156 = vector.broadcast %133 : vector<1x32xf32> to vector<16x32xf32>
    %157 = arith.addf %155, %156 : vector<16x32xf32>
    %158 = arith.truncf %157 : vector<16x32xf32> to vector<16x32xbf16>
    %c0_88 = arith.constant 0 : index
    %c0_89 = arith.constant 0 : index
    %159 = vector.load %arg12[%c0_88, %c0_89] : memref<32x128xbf16, #tpu.memory_space<vmem>>, vector<32x128xbf16>
    %cst_90 = arith.constant dense<0.000000e+00> : vector<16x128xf32>
    %160 = tpu.matmul %158, %159, %cst_90 {dimension_numbers = #tpu.dot_dimension_numbers<[1], [0], [0], [1], [0, 0, 1, 1], [], []>} : vector<16x32xbf16>, vector<32x128xbf16>, vector<16x128xf32> -> vector<16x128xf32>
    %c0_91 = arith.constant 0 : index
    %c0_92 = arith.constant 0 : index
    %161 = vector.load %arg13[%c0_91, %c0_92] : memref<1x128xf32, #tpu.memory_space<vmem>>, vector<1x128xf32>
    %162 = vector.broadcast %161 : vector<1x128xf32> to vector<16x128xf32>
    %163 = arith.addf %160, %162 : vector<16x128xf32>
    %cst_93 = arith.constant 5.000000e-01 : f32
    %164 = vector.broadcast %cst_93 : f32 to vector<16x128xf32>
    %165 = arith.mulf %164, %163 : vector<16x128xf32>
    %cst_94 = arith.constant 0.707106769 : f32
    %166 = vector.broadcast %cst_94 : f32 to vector<16x128xf32>
    %167 = arith.mulf %163, %166 : vector<16x128xf32>
    %168 = math.erf %167 : vector<16x128xf32>
    %cst_95 = arith.constant 1.000000e+00 : f32
    %169 = vector.broadcast %cst_95 : f32 to vector<16x128xf32>
    %170 = arith.addf %169, %168 : vector<16x128xf32>
    %171 = arith.mulf %165, %170 : vector<16x128xf32>
    %172 = arith.truncf %171 : vector<16x128xf32> to vector<16x128xbf16>
    %c0_96 = arith.constant 0 : index
    %c0_97 = arith.constant 0 : index
    %173 = vector.load %arg14[%c0_96, %c0_97] : memref<128x32xbf16, #tpu.memory_space<vmem>>, vector<128x32xbf16>
    %cst_98 = arith.constant dense<0.000000e+00> : vector<16x32xf32>
    %174 = tpu.matmul %172, %173, %cst_98 {dimension_numbers = #tpu.dot_dimension_numbers<[1], [0], [0], [1], [0, 0, 1, 1], [], []>} : vector<16x128xbf16>, vector<128x32xbf16>, vector<16x32xf32> -> vector<16x32xf32>
    %c0_99 = arith.constant 0 : index
    %c0_100 = arith.constant 0 : index
    %175 = vector.load %arg15[%c0_99, %c0_100] : memref<1x32xf32, #tpu.memory_space<vmem>>, vector<1x32xf32>
    %176 = vector.broadcast %175 : vector<1x32xf32> to vector<16x32xf32>
    %177 = arith.addf %174, %176 : vector<16x32xf32>
    %178 = arith.addf %131, %177 : vector<16x32xf32>
    %c0_101 = arith.constant 0 : index
    %c0_102 = arith.constant 0 : index
    %179 = vector.load %arg16[%c0_101, %c0_102] : memref<16x32xf32, #tpu.memory_space<vmem>>, vector<16x32xf32>
    tpu.vector_store %arg16[%c0_101, %c0_102], %178 {strides = array<i32>} : memref<16x32xf32, #tpu.memory_space<vmem>>, vector<16x32xf32>,
    return
  }
  func.func @transform_0(%arg0: i32) -> (i32, i32) {
    %c0_i32 = arith.constant 0 : i32
    %c0_i32_0 = arith.constant 0 : i32
    %c0_i32_1 = arith.constant 0 : i32
    return %c0_i32, %c0_i32_0 : i32, i32
  }
  func.func @transform_1(%arg0: i32) -> (i32, i32) {
    %c0_i32 = arith.constant 0 : i32
    %c0_i32_0 = arith.constant 0 : i32
    %c0_i32_1 = arith.constant 0 : i32
    return %c0_i32, %c0_i32_0 : i32, i32
  }
  func.func @transform_2(%arg0: i32) -> (i32, i32) {
    %c0_i32 = arith.constant 0 : i32
    %c0_i32_0 = arith.constant 0 : i32
    %c0_i32_1 = arith.constant 0 : i32
    return %c0_i32, %c0_i32_0 : i32, i32
  }
  func.func @transform_3(%arg0: i32) -> (i32, i32) {
    %c0_i32 = arith.constant 0 : i32
    %c0_i32_0 = arith.constant 0 : i32
    %c0_i32_1 = arith.constant 0 : i32
    return %c0_i32, %c0_i32_0 : i32, i32
  }
  func.func @transform_4(%arg0: i32) -> (i32, i32, i32) {
    %c0_i32 = arith.constant 0 : i32
    %c0_i32_0 = arith.constant 0 : i32
    %c0_i32_1 = arith.constant 0 : i32
    %c0_i32_2 = arith.constant 0 : i32
    return %c0_i32, %c0_i32_0, %c0_i32_1 : i32, i32, i32
  }
  func.func @transform_5(%arg0: i32) -> (i32, i32, i32) {
    %c0_i32 = arith.constant 0 : i32
    %c0_i32_0 = arith.constant 0 : i32
    %c0_i32_1 = arith.constant 0 : i32
    %c0_i32_2 = arith.constant 0 : i32
    return %c0_i32, %c0_i32_0, %c0_i32_1 : i32, i32, i32
  }
  func.func @transform_6(%arg0: i32) -> (i32, i32, i32) {
    %c0_i32 = arith.constant 0 : i32
    %c0_i32_0 = arith.constant 0 : i32
    %c0_i32_1 = arith.constant 0 : i32
    %c0_i32_2 = arith.constant 0 : i32
    return %c0_i32, %c0_i32_0, %c0_i32_1 : i32, i32, i32
  }
  func.func @transform_7(%arg0: i32) -> (i32, i32, i32) {
    %c0_i32 = arith.constant 0 : i32
    %c0_i32_0 = arith.constant 0 : i32
    %c0_i32_1 = arith.constant 0 : i32
    %c0_i32_2 = arith.constant 0 : i32
    return %c0_i32, %c0_i32_0, %c0_i32_1 : i32, i32, i32
  }
  func.func @transform_8(%arg0: i32) -> (i32, i32) {
    %c0_i32 = arith.constant 0 : i32
    %c0_i32_0 = arith.constant 0 : i32
    %c0_i32_1 = arith.constant 0 : i32
    return %c0_i32, %c0_i32_0 : i32, i32
  }
  func.func @transform_9(%arg0: i32) -> (i32, i32) {
    %c0_i32 = arith.constant 0 : i32
    %c0_i32_0 = arith.constant 0 : i32
    %c0_i32_1 = arith.constant 0 : i32
    return %c0_i32, %c0_i32_0 : i32, i32
  }
  func.func @transform_10(%arg0: i32) -> (i32, i32) {
    %c0_i32 = arith.constant 0 : i32
    %c0_i32_0 = arith.constant 0 : i32
    %c0_i32_1 = arith.constant 0 : i32
    return %c0_i32, %c0_i32_0 : i32, i32
  }
  func.func @transform_11(%arg0: i32) -> (i32, i32) {
    %c0_i32 = arith.constant 0 : i32
    %c0_i32_0 = arith.constant 0 : i32
    %c0_i32_1 = arith.constant 0 : i32
    return %c0_i32, %c0_i32_0 : i32, i32
  }
  func.func @transform_12(%arg0: i32) -> (i32, i32) {
    %c0_i32 = arith.constant 0 : i32
    %c0_i32_0 = arith.constant 0 : i32
    %c0_i32_1 = arith.constant 0 : i32
    return %c0_i32, %c0_i32_0 : i32, i32
  }
  func.func @transform_13(%arg0: i32) -> (i32, i32) {
    %c0_i32 = arith.constant 0 : i32
    %c0_i32_0 = arith.constant 0 : i32
    %c0_i32_1 = arith.constant 0 : i32
    return %c0_i32, %c0_i32_0 : i32, i32
  }
  func.func @transform_14(%arg0: i32) -> (i32, i32) {
    %c0_i32 = arith.constant 0 : i32
    %c0_i32_0 = arith.constant 0 : i32
    %c0_i32_1 = arith.constant 0 : i32
    return %c0_i32, %c0_i32_0 : i32, i32
  }
  func.func @transform_15(%arg0: i32) -> (i32, i32) {
    %c0_i32 = arith.constant 0 : i32
    %c0_i32_0 = arith.constant 0 : i32
    %c0_i32_1 = arith.constant 0 : i32
    return %c0_i32, %c0_i32_0 : i32, i32
  }
}

</mosaic_0001>

<llo_original>
// kernel: tpu_custom_call.1
$region0: #{tpu_custom_call.1}
  #allocation0 [shape = 'u32[]', space=smem, size = 0x4, offset = 0x4, fixed_abs, tag = 'smem constant byte address 0x4 - core index']
  #allocation1 [shape = 'u32[72,128]{1,0:T(1,128)}', space=vmem, size = 0x9000, scoped, tag = 'internal scratch']
  %s0 = inlined_call_operand.vmem [shape: f32[16,32], index: 0, kind: input, shape index: {}]
  %s1 = inlined_call_operand.vmem [shape: f32[16,16], index: 1, kind: input, shape index: {}]
  %s2 = inlined_call_operand.vmem [shape: f32[1,32], index: 2, kind: input, shape index: {}]
  %s3 = inlined_call_operand.vmem [shape: f32[1,32], index: 3, kind: input, shape index: {}]
  %s4 = inlined_call_operand.vmem [shape: bf16[4,32,8], index: 4, kind: input, shape index: {}]
  %s5 = inlined_call_operand.vmem [shape: bf16[4,32,8], index: 5, kind: input, shape index: {}]
  %s6 = inlined_call_operand.vmem [shape: bf16[4,32,8], index: 6, kind: input, shape index: {}]
  %s7 = inlined_call_operand.vmem [shape: bf16[4,8,32], index: 7, kind: input, shape index: {}]
  %s8 = inlined_call_operand.vmem [shape: f32[1,32], index: 8, kind: input, shape index: {}]
  %s9 = inlined_call_operand.vmem [shape: f32[1,32], index: 9, kind: input, shape index: {}]
  %s10 = inlined_call_operand.vmem [shape: f32[1,32], index: 10, kind: input, shape index: {}]
  %s11 = inlined_call_operand.vmem [shape: bf16[32,128], index: 11, kind: input, shape index: {}]
  %s12 = inlined_call_operand.vmem [shape: f32[1,128], index: 12, kind: input, shape index: {}]
  %s13 = inlined_call_operand.vmem [shape: bf16[128,32], index: 13, kind: input, shape index: {}]
  %s14 = inlined_call_operand.vmem [shape: f32[1,32], index: 14, kind: input, shape index: {}]
  %s15 = inlined_call_operand.hbm [shape: f32[16,32], index: 15, kind: output, shape index: {}]
  %s16 = sld [smem:[#allocation0]]
  $region70: #{tpu_custom_call.1} parent=0
    _
  %s18 = ssub.s32 1, %s16
  %s19 = scalar_select 0, %s18, %s16
  $region1: #{tpu_custom_call.1} parent=0
    #allocation2 [shape = 'u8[8192]{0}', space=vmem, size = 0x2000, scoped, tag = 'output window, operand 0, single buffered']
    #allocation3 [shape = 's32[1]{0}', space=sflag, size = 0x4, scoped, tag = 'scoped memory for tpu_custom_call.1']
    %20 = vsyncpa [#allocation3], 0
    // Predicated region
    $region2: #{tpu_custom_call.1} parent=1 // pred_check
      _
    $region3: #{tpu_custom_call.1} parent=1 // pred_check_branch
      %22 = sbr.rel (0) target = $region5
    $region4: #{tpu_custom_call.1} parent=1 // pred_region
      _
    $region5: #{tpu_custom_call.1} parent=1 // pred_fallthru
      _
    // Predicated region
    $region6: #{tpu_custom_call.1} parent=1 // pred_check
      _
    $region7: #{tpu_custom_call.1} parent=1 // pred_check_branch
      %24 = sbr.rel (0) target = $region9
    $region8: #{tpu_custom_call.1} parent=1 // pred_region
      _
    $region9: #{tpu_custom_call.1} parent=1 // pred_fallthru
      _
    // Predicated region
    $region10: #{tpu_custom_call.1} parent=1 // pred_check
      _
    $region11: #{tpu_custom_call.1} parent=1 // pred_check_branch
      %26 = sbr.rel (0) target = $region13
    $region12: #{tpu_custom_call.1} parent=1 // pred_region
      _
    $region13: #{tpu_custom_call.1} parent=1 // pred_fallthru
      _
    // Predicated region
    $region14: #{tpu_custom_call.1} parent=1 // pred_check
      _
    $region15: #{tpu_custom_call.1} parent=1 // pred_check_branch
      %28 = sbr.rel (0) target = $region17
    $region16: #{tpu_custom_call.1} parent=1 // pred_region
      _
    $region17: #{tpu_custom_call.1} parent=1 // pred_fallthru
      _
    // Predicated region
    $region18: #{tpu_custom_call.1} parent=1 // pred_check
      _
    $region19: #{tpu_custom_call.1} parent=1 // pred_check_branch
      %30 = sbr.rel (0) target = $region21
    $region20: #{tpu_custom_call.1} parent=1 // pred_region
      _
    $region21: #{tpu_custom_call.1} parent=1 // pred_fallthru
      _
    // Predicated region
    $region22: #{tpu_custom_call.1} parent=1 // pred_check
      _
    $region23: #{tpu_custom_call.1} parent=1 // pred_check_branch
      %32 = sbr.rel (0) target = $region25
    $region24: #{tpu_custom_call.1} parent=1 // pred_region
      _
    $region25: #{tpu_custom_call.1} parent=1 // pred_fallthru
      _
    // Predicated region
    $region26: #{tpu_custom_call.1} parent=1 // pred_check
      _
    $region27: #{tpu_custom_call.1} parent=1 // pred_check_branch
      %34 = sbr.rel (0) target = $region29
    $region28: #{tpu_custom_call.1} parent=1 // pred_region
      _
    $region29: #{tpu_custom_call.1} parent=1 // pred_fallthru
      _
    // Predicated region
    $region30: #{tpu_custom_call.1} parent=1 // pred_check
      _
    $region31: #{tpu_custom_call.1} parent=1 // pred_check_branch
      %36 = sbr.rel (0) target = $region33
    $region32: #{tpu_custom_call.1} parent=1 // pred_region
      _
    $region33: #{tpu_custom_call.1} parent=1 // pred_fallthru
      _
    // Predicated region
    $region34: #{tpu_custom_call.1} parent=1 // pred_check
      _
    $region35: #{tpu_custom_call.1} parent=1 // pred_check_branch
      %38 = sbr.rel (0) target = $region37
    $region36: #{tpu_custom_call.1} parent=1 // pred_region
      _
    $region37: #{tpu_custom_call.1} parent=1 // pred_fallthru
      _
    // Predicated region
    $region38: #{tpu_custom_call.1} parent=1 // pred_check
      _
    $region39: #{tpu_custom_call.1} parent=1 // pred_check_branch
      %40 = sbr.rel (0) target = $region41
    $region40: #{tpu_custom_call.1} parent=1 // pred_region
      _
    $region41: #{tpu_custom_call.1} parent=1 // pred_fallthru
      _
    // Predicated region
    $region42: #{tpu_custom_call.1} parent=1 // pred_check
      _
    $region43: #{tpu_custom_call.1} parent=1 // pred_check_branch
      %42 = sbr.rel (0) target = $region45
    $region44: #{tpu_custom_call.1} parent=1 // pred_region
      _
    $region45: #{tpu_custom_call.1} parent=1 // pred_fallthru
      _
    // Predicated region
    $region46: #{tpu_custom_call.1} parent=1 // pred_check
      _
    $region47: #{tpu_custom_call.1} parent=1 // pred_check_branch
      %44 = sbr.rel (0) target = $region49
    $region48: #{tpu_custom_call.1} parent=1 // pred_region
      _
    $region49: #{tpu_custom_call.1} parent=1 // pred_fallthru
      _
    // Predicated region
    $region50: #{tpu_custom_call.1} parent=1 // pred_check
      _
    $region51: #{tpu_custom_call.1} parent=1 // pred_check_branch
      %46 = sbr.rel (0) target = $region53
    $region52: #{tpu_custom_call.1} parent=1 // pred_region
      _
    $region53: #{tpu_custom_call.1} parent=1 // pred_fallthru
      _
    // Predicated region
    $region54: #{tpu_custom_call.1} parent=1 // pred_check
      _
    $region55: #{tpu_custom_call.1} parent=1 // pred_check_branch
      %48 = sbr.rel (0) target = $region57
    $region56: #{tpu_custom_call.1} parent=1 // pred_region
      _
    $region57: #{tpu_custom_call.1} parent=1 // pred_fallthru
      _
    // Predicated region
    $region58: #{tpu_custom_call.1} parent=1 // pred_check
      _
    $region59: #{tpu_custom_call.1} parent=1 // pred_check_branch
      %50 = sbr.rel (0) target = $region61
    $region60: #{tpu_custom_call.1} parent=1 // pred_region
      _
    $region61: #{tpu_custom_call.1} parent=1 // pred_fallthru
      _
    %v52 = vld [vmem:[%s0] sm:$0xff]
    %v53 = vld [vmem:[%s0 + $0x8] sm:$0xff]
    %v54 = vld [vmem:[%s2] sm:$0x1]
    %v55 = vld [vmem:[%s3] sm:$0x1]
    %vm56 = vcmask 261120
    %v57 = vsel %vm56, %v52, 0.0
    %58 = vadd.xlane.f32.xlu0 %v57
    %v59 = vpop.xlane.xlu0 %58
    %v60 = vsel %vm56, %v53, 0.0
    %61 = vadd.xlane.f32.xlu0 %v60
    %v62 = vpop.xlane.xlu0 %61
    %v63 = vrcp.pop 32.0
    %v64 = vmul.f32 32.0, %v63
    %v65 = vsub.f32 1.0, %v64
    %v66 = vmul.f32 %v63, %v65
    %v67 = vadd.f32 %v63, %v66
    %vm68 = vweird.f32 %v63
    %v69 = vsel %vm68, %v63, %v67
    %v70 = vmul.f32 %v59, %v69
    %v71 = vmul.f32 %v62, %v69
    %v72 = vsub.f32 %v52, %v70
    %v73 = vsub.f32 %v53, %v71
    %v74 = vmul.f32 %v72, %v72
    %v75 = vmul.f32 %v73, %v73
    %v76 = vsel %vm56, %v74, 0.0
    %77 = vadd.xlane.f32.xlu0 %v76
    %v78 = vpop.xlane.xlu0 %77
    %v79 = vsel %vm56, %v75, 0.0
    %80 = vadd.xlane.f32.xlu0 %v79
    %v81 = vpop.xlane.xlu0 %80
    %v82 = vmul.f32 %v78, %v69
    %v83 = vmul.f32 %v81, %v69
    %v84 = vadd.f32 %v82, 1e-05
    %v85 = vadd.f32 %v83, 1e-05
    %v86 = vrsqrt.pop %v84
    %v87 = vmul.f32 %v86, %v84
    %v88 = vmul.f32 %v87, %v86
    %v89 = vmul.f32 0.5, %v88
    %v90 = vsub.f32 1.5, %v89
    %v91 = vmul.f32 %v86, %v90
    %vm92 = vweird.f32 %v84
    %vm93 = vweird.f32 %v86
    %vm94 = vmor %vm92, %vm93
    %v95 = vsel %vm94, %v86, %v91
    %v96 = vrsqrt.pop %v85
    %v97 = vmul.f32 %v96, %v85
    %v98 = vmul.f32 %v97, %v96
    %v99 = vmul.f32 0.5, %v98
    %v100 = vsub.f32 1.5, %v99
    %v101 = vmul.f32 %v96, %v100
    %vm102 = vweird.f32 %v85
    %vm103 = vweird.f32 %v96
    %vm104 = vmor %vm102, %vm103
    %v105 = vsel %vm104, %v96, %v101
    %v106 = vmul.f32 %v72, %v95
    %v107 = vmul.f32 %v73, %v105
    %v109 = vperm.slane %v54, 0
    %v111 = vmul.f32 %v106, %v109
    %v112 = vmul.f32 %v107, %v109
    %v114 = vperm.slane %v55, 0
    %v116 = vadd.f32 %v111, %v114
    %v117 = vadd.f32 %v112, %v114
    %v118 = vpack.c.bf16 %v117, %v116
    %v119 = vld [vmem:[%s4] sm:$0xf]
    %v120 = vld [vmem:[%s4 + $0x4] sm:$0xf]
    %v121 = vld [vmem:[%s4 + $0x8] sm:$0xf]
    %v122 = vld [vmem:[%s4 + $0xc] sm:$0xf]
    %v127 = vunpack.c.l.b16 %v119
    %v128 = vunpack.c.l.b16 %v120
    %v129 = vunpack.c.l.b16 %v121
    %v130 = vunpack.c.l.b16 %v122
    %v131 = vpack.c.b16 %v128, %v127
    %v132 = vpack.c.b16 %v130, %v129
    %v136 = vsel %vm56, %v118, 0
    %138 = vmatpush.bf16.msra.mxu0 0
    %139 = vmatpush.bf16.msra.mxu0 0
    %140 = vmatpush.bf16.msra.mxu0 0
    %141 = vmatpush.bf16.msra.mxu0 0
    %142 = vmatpush.bf16.msra.mxu0 0
    %143 = vmatpush.bf16.msra.mxu0 0
    %144 = vmatpush.bf16.msra.mxu0 %v132
    %145 = vmatpush.bf16.msra.mxu0 %v131
    %146 = vmatmul.bf16.gmra.mxu0 %v136
    %v147 = vpop.f32.mrf.mxu0
    %v148 = vadd.f32 0.0, %v147
    %v149 = vpop.f32.mrf.mxu0
    %v150 = vadd.f32 0.0, %v149
    %151 = vdwg.mxu0
    %v152 = vld [vmem:[%s5] sm:$0xf]
    %v153 = vld [vmem:[%s5 + $0x4] sm:$0xf]
    %v154 = vld [vmem:[%s5 + $0x8] sm:$0xf]
    %v155 = vld [vmem:[%s5 + $0xc] sm:$0xf]
    %v160 = vunpack.c.l.b16 %v152
    %v161 = vunpack.c.l.b16 %v153
    %v162 = vunpack.c.l.b16 %v154
    %v163 = vunpack.c.l.b16 %v155
    %v164 = vpack.c.b16 %v161, %v160
    %v165 = vpack.c.b16 %v163, %v162
    %168 = vmatpush.bf16.msra.mxu0 0
    %169 = vmatpush.bf16.msra.mxu0 0
    %170 = vmatpush.bf16.msra.mxu0 0
    %171 = vmatpush.bf16.msra.mxu0 0
    %172 = vmatpush.bf16.msra.mxu0 0
    %173 = vmatpush.bf16.msra.mxu0 0
    %174 = vmatpush.bf16.msra.mxu0 %v165
    %175 = vmatpush.bf16.msra.mxu0 %v164
    %176 = vmatmul.bf16.gmra.mxu0 %v136
    %v177 = vpop.f32.mrf.mxu0
    %v178 = vadd.f32 0.0, %v177
    %v179 = vpop.f32.mrf.mxu0
    %v180 = vadd.f32 0.0, %v179
    %181 = vdwg.mxu0
    %v182 = vld [vmem:[%s6] sm:$0xf]
    %v183 = vld [vmem:[%s6 + $0x4] sm:$0xf]
    %v184 = vld [vmem:[%s6 + $0x8] sm:$0xf]
    %v185 = vld [vmem:[%s6 + $0xc] sm:$0xf]
    %v190 = vunpack.c.l.b16 %v182
    %v191 = vunpack.c.l.b16 %v183
    %v192 = vunpack.c.l.b16 %v184
    %v193 = vunpack.c.l.b16 %v185
    %v194 = vpack.c.b16 %v191, %v190
    %v195 = vpack.c.b16 %v193, %v192
    %198 = vmatpush.bf16.msra.mxu0 0
    %199 = vmatpush.bf16.msra.mxu0 0
    %200 = vmatpush.bf16.msra.mxu0 0
    %201 = vmatpush.bf16.msra.mxu0 0
    %202 = vmatpush.bf16.msra.mxu0 0
    %203 = vmatpush.bf16.msra.mxu0 0
    %204 = vmatpush.bf16.msra.mxu0 %v195
    %205 = vmatpush.bf16.msra.mxu0 %v194
    %206 = vmatmul.bf16.gmra.mxu0 %v136
    %v207 = vpop.f32.mrf.mxu0
    %v208 = vadd.f32 0.0, %v207
    %v209 = vpop.f32.mrf.mxu0
    %v210 = vadd.f32 0.0, %v209
    %211 = vdwg.mxu0
    %s212 = scalar_lea.vmem %s4, 16
    %v213 = vld [vmem:[%s212] sm:$0xf]
    %v214 = vld [vmem:[%s212 + $0x4] sm:$0xf]
    %v215 = vld [vmem:[%s212 + $0x8] sm:$0xf]
    %v216 = vld [vmem:[%s212 + $0xc] sm:$0xf]
    %v221 = vunpack.c.l.b16 %v213
    %v222 = vunpack.c.l.b16 %v214
    %v223 = vunpack.c.l.b16 %v215
    %v224 = vunpack.c.l.b16 %v216
    %v225 = vpack.c.b16 %v222, %v221
    %v226 = vpack.c.b16 %v224, %v223
    %229 = vmatpush.bf16.msra.mxu0 0
    %230 = vmatpush.bf16.msra.mxu0 0
    %231 = vmatpush.bf16.msra.mxu0 0
    %232 = vmatpush.bf16.msra.mxu0 0
    %233 = vmatpush.bf16.msra.mxu0 0
    %234 = vmatpush.bf16.msra.mxu0 0
    %235 = vmatpush.bf16.msra.mxu0 %v226
    %236 = vmatpush.bf16.msra.mxu0 %v225
    %237 = vmatmul.bf16.gmra.mxu0 %v136
    %v238 = vpop.f32.mrf.mxu0
    %v239 = vadd.f32 0.0, %v238
    %v240 = vpop.f32.mrf.mxu0
    %v241 = vadd.f32 0.0, %v240
    %242 = vdwg.mxu0
    %s243 = scalar_lea.vmem %s5, 16
    %v244 = vld [vmem:[%s243] sm:$0xf]
    %v245 = vld [vmem:[%s243 + $0x4] sm:$0xf]
    %v246 = vld [vmem:[%s243 + $0x8] sm:$0xf]
    %v247 = vld [vmem:[%s243 + $0xc] sm:$0xf]
    %v252 = vunpack.c.l.b16 %v244
    %v253 = vunpack.c.l.b16 %v245
    %v254 = vunpack.c.l.b16 %v246
    %v255 = vunpack.c.l.b16 %v247
    %v256 = vpack.c.b16 %v253, %v252
    %v257 = vpack.c.b16 %v255, %v254
    %260 = vmatpush.bf16.msra.mxu0 0
    %261 = vmatpush.bf16.msra.mxu0 0
    %262 = vmatpush.bf16.msra.mxu0 0
    %263 = vmatpush.bf16.msra.mxu0 0
    %264 = vmatpush.bf16.msra.mxu0 0
    %265 = vmatpush.bf16.msra.mxu0 0
    %266 = vmatpush.bf16.msra.mxu0 %v257
    %267 = vmatpush.bf16.msra.mxu0 %v256
    %268 = vmatmul.bf16.gmra.mxu0 %v136
    %v269 = vpop.f32.mrf.mxu0
    %v270 = vadd.f32 0.0, %v269
    %v271 = vpop.f32.mrf.mxu0
    %v272 = vadd.f32 0.0, %v271
    %273 = vdwg.mxu0
    %s274 = scalar_lea.vmem %s6, 16
    %v275 = vld [vmem:[%s274] sm:$0xf]
    %v276 = vld [vmem:[%s274 + $0x4] sm:$0xf]
    %v277 = vld [vmem:[%s274 + $0x8] sm:$0xf]
    %v278 = vld [vmem:[%s274 + $0xc] sm:$0xf]
    %v283 = vunpack.c.l.b16 %v275
    %v284 = vunpack.c.l.b16 %v276
    %v285 = vunpack.c.l.b16 %v277
    %v286 = vunpack.c.l.b16 %v278
    %v287 = vpack.c.b16 %v284, %v283
    %v288 = vpack.c.b16 %v286, %v285
    %291 = vmatpush.bf16.msra.mxu0 0
    %292 = vmatpush.bf16.msra.mxu0 0
    %293 = vmatpush.bf16.msra.mxu0 0
    %294 = vmatpush.bf16.msra.mxu0 0
    %295 = vmatpush.bf16.msra.mxu0 0
    %296 = vmatpush.bf16.msra.mxu0 0
    %297 = vmatpush.bf16.msra.mxu0 %v288
    %298 = vmatpush.bf16.msra.mxu0 %v287
    %299 = vmatmul.bf16.gmra.mxu0 %v136
    %v300 = vpop.f32.mrf.mxu0
    %v301 = vadd.f32 0.0, %v300
    %v302 = vpop.f32.mrf.mxu0
    %v303 = vadd.f32 0.0, %v302
    %304 = vdwg.mxu0
    %s305 = scalar_lea.vmem %s4, 32
    %v306 = vld [vmem:[%s305] sm:$0xf]
    %v307 = vld [vmem:[%s305 + $0x4] sm:$0xf]
    %v308 = vld [vmem:[%s305 + $0x8] sm:$0xf]
    %v309 = vld [vmem:[%s305 + $0xc] sm:$0xf]
    %v314 = vunpack.c.l.b16 %v306
    %v315 = vunpack.c.l.b16 %v307
    %v316 = vunpack.c.l.b16 %v308
    %v317 = vunpack.c.l.b16 %v309
    %v318 = vpack.c.b16 %v315, %v314
    %v319 = vpack.c.b16 %v317, %v316
    %322 = vmatpush.bf16.msra.mxu0 0
    %323 = vmatpush.bf16.msra.mxu0 0
    %324 = vmatpush.bf16.msra.mxu0 0
    %325 = vmatpush.bf16.msra.mxu0 0
    %326 = vmatpush.bf16.msra.mxu0 0
    %327 = vmatpush.bf16.msra.mxu0 0
    %328 = vmatpush.bf16.msra.mxu0 %v319
    %329 = vmatpush.bf16.msra.mxu0 %v318
    %330 = vmatmul.bf16.gmra.mxu0 %v136
    %v331 = vpop.f32.mrf.mxu0
    %v332 = vadd.f32 0.0, %v331
    %v333 = vpop.f32.mrf.mxu0
    %v334 = vadd.f32 0.0, %v333
    %335 = vdwg.mxu0
    %s336 = scalar_lea.vmem %s5, 32
    %v337 = vld [vmem:[%s336] sm:$0xf]
    %v338 = vld [vmem:[%s336 + $0x4] sm:$0xf]
    %v339 = vld [vmem:[%s336 + $0x8] sm:$0xf]
    %v340 = vld [vmem:[%s336 + $0xc] sm:$0xf]
    %v345 = vunpack.c.l.b16 %v337
    %v346 = vunpack.c.l.b16 %v338
    %v347 = vunpack.c.l.b16 %v339
    %v348 = vunpack.c.l.b16 %v340
    %v349 = vpack.c.b16 %v346, %v345
    %v350 = vpack.c.b16 %v348, %v347
    %353 = vmatpush.bf16.msra.mxu0 0
    %354 = vmatpush.bf16.msra.mxu0 0
    %355 = vmatpush.bf16.msra.mxu0 0
    %356 = vmatpush.bf16.msra.mxu0 0
    %357 = vmatpush.bf16.msra.mxu0 0
    %358 = vmatpush.bf16.msra.mxu0 0
    %359 = vmatpush.bf16.msra.mxu0 %v350
    %360 = vmatpush.bf16.msra.mxu0 %v349
    %361 = vmatmul.bf16.gmra.mxu0 %v136
    %v362 = vpop.f32.mrf.mxu0
    %v363 = vadd.f32 0.0, %v362
    %v364 = vpop.f32.mrf.mxu0
    %v365 = vadd.f32 0.0, %v364
    %366 = vdwg.mxu0
    %s367 = scalar_lea.vmem %s6, 32
    %v368 = vld [vmem:[%s367] sm:$0xf]
    %v369 = vld [vmem:[%s367 + $0x4] sm:$0xf]
    %v370 = vld [vmem:[%s367 + $0x8] sm:$0xf]
    %v371 = vld [vmem:[%s367 + $0xc] sm:$0xf]
    %v376 = vunpack.c.l.b16 %v368
    %v377 = vunpack.c.l.b16 %v369
    %v378 = vunpack.c.l.b16 %v370
    %v379 = vunpack.c.l.b16 %v371
    %v380 = vpack.c.b16 %v377, %v376
    %v381 = vpack.c.b16 %v379, %v378
    %384 = vmatpush.bf16.msra.mxu0 0
    %385 = vmatpush.bf16.msra.mxu0 0
    %386 = vmatpush.bf16.msra.mxu0 0
    %387 = vmatpush.bf16.msra.mxu0 0
    %388 = vmatpush.bf16.msra.mxu0 0
    %389 = vmatpush.bf16.msra.mxu0 0
    %390 = vmatpush.bf16.msra.mxu0 %v381
    %391 = vmatpush.bf16.msra.mxu0 %v380
    %392 = vmatmul.bf16.gmra.mxu0 %v136
    %v393 = vpop.f32.mrf.mxu0
    %v394 = vadd.f32 0.0, %v393
    %v395 = vpop.f32.mrf.mxu0
    %v396 = vadd.f32 0.0, %v395
    %397 = vdwg.mxu0
    %s398 = scalar_lea.vmem %s4, 48
    %v399 = vld [vmem:[%s398] sm:$0xf]
    %v400 = vld [vmem:[%s398 + $0x4] sm:$0xf]
    %v401 = vld [vmem:[%s398 + $0x8] sm:$0xf]
    %v402 = vld [vmem:[%s398 + $0xc] sm:$0xf]
    %v407 = vunpack.c.l.b16 %v399
    %v408 = vunpack.c.l.b16 %v400
    %v409 = vunpack.c.l.b16 %v401
    %v410 = vunpack.c.l.b16 %v402
    %v411 = vpack.c.b16 %v408, %v407
    %v412 = vpack.c.b16 %v410, %v409
    %415 = vmatpush.bf16.msra.mxu0 0
    %416 = vmatpush.bf16.msra.mxu0 0
    %417 = vmatpush.bf16.msra.mxu0 0
    %418 = vmatpush.bf16.msra.mxu0 0
    %419 = vmatpush.bf16.msra.mxu0 0
    %420 = vmatpush.bf16.msra.mxu0 0
    %421 = vmatpush.bf16.msra.mxu0 %v412
    %422 = vmatpush.bf16.msra.mxu0 %v411
    %423 = vmatmul.bf16.gmra.mxu0 %v136
    %v424 = vpop.f32.mrf.mxu0
    %v425 = vadd.f32 0.0, %v424
    %v426 = vpop.f32.mrf.mxu0
    %v427 = vadd.f32 0.0, %v426
    %428 = vdwg.mxu0
    %s429 = scalar_lea.vmem %s5, 48
    %v430 = vld [vmem:[%s429] sm:$0xf]
    %v431 = vld [vmem:[%s429 + $0x4] sm:$0xf]
    %v432 = vld [vmem:[%s429 + $0x8] sm:$0xf]
    %v433 = vld [vmem:[%s429 + $0xc] sm:$0xf]
    %v438 = vunpack.c.l.b16 %v430
    %v439 = vunpack.c.l.b16 %v431
    %v440 = vunpack.c.l.b16 %v432
    %v441 = vunpack.c.l.b16 %v433
    %v442 = vpack.c.b16 %v439, %v438
    %v443 = vpack.c.b16 %v441, %v440
    %446 = vmatpush.bf16.msra.mxu0 0
    %447 = vmatpush.bf16.msra.mxu0 0
    %448 = vmatpush.bf16.msra.mxu0 0
    %449 = vmatpush.bf16.msra.mxu0 0
    %450 = vmatpush.bf16.msra.mxu0 0
    %451 = vmatpush.bf16.msra.mxu0 0
    %452 = vmatpush.bf16.msra.mxu0 %v443
    %453 = vmatpush.bf16.msra.mxu0 %v442
    %454 = vmatmul.bf16.gmra.mxu0 %v136
    %v455 = vpop.f32.mrf.mxu0
    %v456 = vadd.f32 0.0, %v455
    %v457 = vpop.f32.mrf.mxu0
    %v458 = vadd.f32 0.0, %v457
    %459 = vdwg.mxu0
    %s460 = scalar_lea.vmem %s6, 48
    %v461 = vld [vmem:[%s460] sm:$0xf]
    %v462 = vld [vmem:[%s460 + $0x4] sm:$0xf]
    %v463 = vld [vmem:[%s460 + $0x8] sm:$0xf]
    %v464 = vld [vmem:[%s460 + $0xc] sm:$0xf]
    %v469 = vunpack.c.l.b16 %v461
    %v470 = vunpack.c.l.b16 %v462
    %v471 = vunpack.c.l.b16 %v463
    %v472 = vunpack.c.l.b16 %v464
    %v473 = vpack.c.b16 %v470, %v469
    %v474 = vpack.c.b16 %v472, %v471
    %477 = vmatpush.bf16.msra.mxu0 0
    %478 = vmatpush.bf16.msra.mxu0 0
    %479 = vmatpush.bf16.msra.mxu0 0
    %480 = vmatpush.bf16.msra.mxu0 0
    %481 = vmatpush.bf16.msra.mxu0 0
    %482 = vmatpush.bf16.msra.mxu0 0
    %483 = vmatpush.bf16.msra.mxu0 %v474
    %484 = vmatpush.bf16.msra.mxu0 %v473
    %485 = vmatmul.bf16.gmra.mxu0 %v136
    %v486 = vpop.f32.mrf.mxu0
    %v487 = vadd.f32 0.0, %v486
    %v488 = vpop.f32.mrf.mxu0
    %v489 = vadd.f32 0.0, %v488
    %490 = vdwg.mxu0
    %v491 = vpack.c.bf16 %v148, %v148
    %v492 = vpack.c.bf16 %v150, %v150
    %v493 = vpack.c.bf16 %v239, %v239
    %v494 = vpack.c.bf16 %v241, %v241
    %v495 = vpack.c.bf16 %v332, %v332
    %v496 = vpack.c.bf16 %v334, %v334
    %v497 = vpack.c.bf16 %v425, %v425
    %v498 = vpack.c.bf16 %v427, %v427
    %v499 = vpack.c.bf16 %v178, %v178
    %v500 = vpack.c.bf16 %v180, %v180
    %v501 = vpack.c.bf16 %v270, %v270
    %v502 = vpack.c.bf16 %v272, %v272
    %v503 = vpack.c.bf16 %v363, %v363
    %v504 = vpack.c.bf16 %v365, %v365
    %v505 = vpack.c.bf16 %v456, %v456
    %v506 = vpack.c.bf16 %v458, %v458
    %v507 = vpack.c.bf16 %v208, %v208
    %v508 = vpack.c.bf16 %v210, %v210
    %v509 = vpack.c.bf16 %v301, %v301
    %v510 = vpack.c.bf16 %v303, %v303
    %v511 = vpack.c.bf16 %v394, %v394
    %v512 = vpack.c.bf16 %v396, %v396
    %v513 = vpack.c.bf16 %v487, %v487
    %v514 = vpack.c.bf16 %v489, %v489
    %v515 = vld [vmem:[%s1] sm:$0xff]
    %v516 = vld [vmem:[%s1 + $0x8] sm:$0xff]
    %v519 = vunpack.c.l.b16 %v491
    %v520 = vunpack.c.l.b16 %v492
    %v521 = vpack.c.b16 %v520, %v519
    %v524 = vunpack.c.l.b16 %v499
    %v525 = vunpack.c.l.b16 %v500
    %v526 = vpack.c.b16 %v525, %v524
    %vm527 = vcmask 64512
    %v529 = vsel %vm527, %v521, 0
    %v532 = vsel %vm527, %v526, 0
    %534 = vmatpush.bf16.xpose.msra.mxu0 0
    %535 = vmatpush.bf16.xpose.msra.mxu0 0
    %536 = vmatpush.bf16.xpose.msra.mxu0 0
    %537 = vmatpush.bf16.xpose.msra.mxu0 0
    %538 = vmatpush.bf16.xpose.msra.mxu0 0
    %539 = vmatpush.bf16.xpose.msra.mxu0 0
    %540 = vmatpush.bf16.xpose.msra.mxu0 0
    %541 = vmatpush.bf16.xpose.msra.mxu0 %v532
    %542 = vmatmul.bf16.gmra.mxu0 %v529
    %v543 = vpop.f32.mrf.mxu0
    %v544 = vadd.f32 %v515, %v543
    %v545 = vpop.f32.mrf.mxu0
    %v546 = vadd.f32 %v516, %v545
    %547 = vdwg.mxu0
    %v550 = vunpack.c.l.b16 %v493
    %v551 = vunpack.c.l.b16 %v494
    %v552 = vpack.c.b16 %v551, %v550
    %v555 = vunpack.c.l.b16 %v501
    %v556 = vunpack.c.l.b16 %v502
    %v557 = vpack.c.b16 %v556, %v555
    %v559 = vsel %vm527, %v552, 0
    %v562 = vsel %vm527, %v557, 0
    %564 = vmatpush.bf16.xpose.msra.mxu0 0
    %565 = vmatpush.bf16.xpose.msra.mxu0 0
    %566 = vmatpush.bf16.xpose.msra.mxu0 0
    %567 = vmatpush.bf16.xpose.msra.mxu0 0
    %568 = vmatpush.bf16.xpose.msra.mxu0 0
    %569 = vmatpush.bf16.xpose.msra.mxu0 0
    %570 = vmatpush.bf16.xpose.msra.mxu0 0
    %571 = vmatpush.bf16.xpose.msra.mxu0 %v562
    %572 = vmatmul.bf16.gmra.mxu0 %v559
    %v573 = vpop.f32.mrf.mxu0
    %v574 = vadd.f32 %v515, %v573
    %v575 = vpop.f32.mrf.mxu0
    %v576 = vadd.f32 %v516, %v575
    %577 = vdwg.mxu0
    %v580 = vunpack.c.l.b16 %v495
    %v581 = vunpack.c.l.b16 %v496
    %v582 = vpack.c.b16 %v581, %v580
    %v585 = vunpack.c.l.b16 %v503
    %v586 = vunpack.c.l.b16 %v504
    %v587 = vpack.c.b16 %v586, %v585
    %v589 = vsel %vm527, %v582, 0
    %v592 = vsel %vm527, %v587, 0
    %594 = vmatpush.bf16.xpose.msra.mxu0 0
    %595 = vmatpush.bf16.xpose.msra.mxu0 0
    %596 = vmatpush.bf16.xpose.msra.mxu0 0
    %597 = vmatpush.bf16.xpose.msra.mxu0 0
    %598 = vmatpush.bf16.xpose.msra.mxu0 0
    %599 = vmatpush.bf16.xpose.msra.mxu0 0
    %600 = vmatpush.bf16.xpose.msra.mxu0 0
    %601 = vmatpush.bf16.xpose.msra.mxu0 %v592
    %602 = vmatmul.bf16.gmra.mxu0 %v589
    %v603 = vpop.f32.mrf.mxu0
    %v604 = vadd.f32 %v515, %v603
    %v605 = vpop.f32.mrf.mxu0
    %v606 = vadd.f32 %v516, %v605
    %607 = vdwg.mxu0
    %v610 = vunpack.c.l.b16 %v497
    %v611 = vunpack.c.l.b16 %v498
    %v612 = vpack.c.b16 %v611, %v610
    %v615 = vunpack.c.l.b16 %v505
    %v616 = vunpack.c.l.b16 %v506
    %v617 = vpack.c.b16 %v616, %v615
    %v619 = vsel %vm527, %v612, 0
    %v622 = vsel %vm527, %v617, 0
    %624 = vmatpush.bf16.xpose.msra.mxu0 0
    %625 = vmatpush.bf16.xpose.msra.mxu0 0
    %626 = vmatpush.bf16.xpose.msra.mxu0 0
    %627 = vmatpush.bf16.xpose.msra.mxu0 0
    %628 = vmatpush.bf16.xpose.msra.mxu0 0
    %629 = vmatpush.bf16.xpose.msra.mxu0 0
    %630 = vmatpush.bf16.xpose.msra.mxu0 0
    %631 = vmatpush.bf16.xpose.msra.mxu0 %v622
    %632 = vmatmul.bf16.gmra.mxu0 %v619
    %v633 = vpop.f32.mrf.mxu0
    %v634 = vadd.f32 %v515, %v633
    %v635 = vpop.f32.mrf.mxu0
    %v636 = vadd.f32 %v516, %v635
    %637 = vdwg.mxu0
    %vm638 = vcmask 130048
    %v639 = vsel %vm638, %v544, -inf
    %640 = vmax.xlane.f32.xlu0 %v639
    %v641 = vpop.xlane.xlu0 %640
    %v642 = vsel %vm638, %v546, -inf
    %643 = vmax.xlane.f32.xlu0 %v642
    %v644 = vpop.xlane.xlu0 %643
    %v645 = vsel %vm638, %v574, -inf
    %646 = vmax.xlane.f32.xlu0 %v645
    %v647 = vpop.xlane.xlu0 %646
    %v648 = vsel %vm638, %v576, -inf
    %649 = vmax.xlane.f32.xlu0 %v648
    %v650 = vpop.xlane.xlu0 %649
    %v651 = vsel %vm638, %v604, -inf
    %652 = vmax.xlane.f32.xlu0 %v651
    %v653 = vpop.xlane.xlu0 %652
    %v654 = vsel %vm638, %v606, -inf
    %655 = vmax.xlane.f32.xlu0 %v654
    %v656 = vpop.xlane.xlu0 %655
    %v657 = vsel %vm638, %v634, -inf
    %658 = vmax.xlane.f32.xlu0 %v657
    %v659 = vpop.xlane.xlu0 %658
    %v660 = vsel %vm638, %v636, -inf
    %661 = vmax.xlane.f32.xlu0 %v660
    %v662 = vpop.xlane.xlu0 %661
    %v663 = vsub.f32 %v544, %v641
    %v664 = vsub.f32 %v546, %v644
    %v665 = vsub.f32 %v574, %v647
    %v666 = vsub.f32 %v576, %v650
    %v667 = vsub.f32 %v604, %v653
    %v668 = vsub.f32 %v606, %v656
    %v669 = vsub.f32 %v634, %v659
    %v670 = vsub.f32 %v636, %v662
    %v671 = vmul.f32 %v663, 1.442695
    %v672 = vpow.pop %v671
    %v673 = vmul.f32 %v664, 1.442695
    %v674 = vpow.pop %v673
    %v675 = vmul.f32 %v665, 1.442695
    %v676 = vpow.pop %v675
    %v677 = vmul.f32 %v666, 1.442695
    %v678 = vpow.pop %v677
    %v679 = vmul.f32 %v667, 1.442695
    %v680 = vpow.pop %v679
    %v681 = vmul.f32 %v668, 1.442695
    %v682 = vpow.pop %v681
    %v683 = vmul.f32 %v669, 1.442695
    %v684 = vpow.pop %v683
    %v685 = vmul.f32 %v670, 1.442695
    %v686 = vpow.pop %v685
    %v687 = vsel %vm638, %v672, 0.0
    %688 = vadd.xlane.f32.xlu0 %v687
    %v689 = vpop.xlane.xlu0 %688
    %v690 = vsel %vm638, %v674, 0.0
    %691 = vadd.xlane.f32.xlu0 %v690
    %v692 = vpop.xlane.xlu0 %691
    %v693 = vsel %vm638, %v676, 0.0
    %694 = vadd.xlane.f32.xlu0 %v693
    %v695 = vpop.xlane.xlu0 %694
    %v696 = vsel %vm638, %v678, 0.0
    %697 = vadd.xlane.f32.xlu0 %v696
    %v698 = vpop.xlane.xlu0 %697
    %v699 = vsel %vm638, %v680, 0.0
    %700 = vadd.xlane.f32.xlu0 %v699
    %v701 = vpop.xlane.xlu0 %700
    %v702 = vsel %vm638, %v682, 0.0
    %703 = vadd.xlane.f32.xlu0 %v702
    %v704 = vpop.xlane.xlu0 %703
    %v705 = vsel %vm638, %v684, 0.0
    %706 = vadd.xlane.f32.xlu0 %v705
    %v707 = vpop.xlane.xlu0 %706
    %v708 = vsel %vm638, %v686, 0.0
    %709 = vadd.xlane.f32.xlu0 %v708
    %v710 = vpop.xlane.xlu0 %709
    %v711 = vrcp.pop %v689
    %v712 = vrcp.pop %v692
    %v713 = vrcp.pop %v695
    %v714 = vrcp.pop %v698
    %v715 = vrcp.pop %v701
    %v716 = vrcp.pop %v704
    %v717 = vrcp.pop %v707
    %v718 = vrcp.pop %v710
    %v719 = vmul.f32 %v672, %v711
    %v720 = vmul.f32 %v674, %v712
    %v721 = vmul.f32 %v676, %v713
    %v722 = vmul.f32 %v678, %v714
    %v723 = vmul.f32 %v680, %v715
    %v724 = vmul.f32 %v682, %v716
    %v725 = vmul.f32 %v684, %v717
    %v726 = vmul.f32 %v686, %v718
    %v727 = vpack.c.bf16 %v719, %v719
    %v728 = vpack.c.bf16 %v720, %v720
    %v729 = vpack.c.bf16 %v721, %v721
    %v730 = vpack.c.bf16 %v722, %v722
    %v731 = vpack.c.bf16 %v723, %v723
    %v732 = vpack.c.bf16 %v724, %v724
    %v733 = vpack.c.bf16 %v725, %v725
    %v734 = vpack.c.bf16 %v726, %v726
    %v737 = vunpack.c.l.b16 %v727
    %v738 = vunpack.c.l.b16 %v728
    %v739 = vpack.c.b16 %v738, %v737
    %v742 = vunpack.c.l.b16 %v507
    %v743 = vunpack.c.l.b16 %v508
    %v744 = vpack.c.b16 %v743, %v742
    %v747 = vsel %vm638, %v739, 0
    %749 = vmatpush.bf16.msra.mxu0 0
    %750 = vmatpush.bf16.msra.mxu0 0
    %751 = vmatpush.bf16.msra.mxu0 0
    %752 = vmatpush.bf16.msra.mxu0 0
    %753 = vmatpush.bf16.msra.mxu0 0
    %754 = vmatpush.bf16.msra.mxu0 0
    %755 = vmatpush.bf16.msra.mxu0 0
    %756 = vmatpush.bf16.msra.mxu0 %v744
    %757 = vmatmul.bf16.gmra.mxu0 %v747
    %v758 = vpop.f32.mrf.mxu0
    %v759 = vadd.f32 0.0, %v758
    %v760 = vpop.f32.mrf.mxu0
    %v761 = vadd.f32 0.0, %v760
    %762 = vdwg.mxu0
    %v765 = vunpack.c.l.b16 %v729
    %v766 = vunpack.c.l.b16 %v730
    %v767 = vpack.c.b16 %v766, %v765
    %v770 = vunpack.c.l.b16 %v509
    %v771 = vunpack.c.l.b16 %v510
    %v772 = vpack.c.b16 %v771, %v770
    %v775 = vsel %vm638, %v767, 0
    %777 = vmatpush.bf16.msra.mxu0 0
    %778 = vmatpush.bf16.msra.mxu0 0
    %779 = vmatpush.bf16.msra.mxu0 0
    %780 = vmatpush.bf16.msra.mxu0 0
    %781 = vmatpush.bf16.msra.mxu0 0
    %782 = vmatpush.bf16.msra.mxu0 0
    %783 = vmatpush.bf16.msra.mxu0 0
    %784 = vmatpush.bf16.msra.mxu0 %v772
    %785 = vmatmul.bf16.gmra.mxu0 %v775
    %v786 = vpop.f32.mrf.mxu0
    %v787 = vadd.f32 0.0, %v786
    %v788 = vpop.f32.mrf.mxu0
    %v789 = vadd.f32 0.0, %v788
    %790 = vdwg.mxu0
    %v793 = vunpack.c.l.b16 %v731
    %v794 = vunpack.c.l.b16 %v732
    %v795 = vpack.c.b16 %v794, %v793
    %v798 = vunpack.c.l.b16 %v511
    %v799 = vunpack.c.l.b16 %v512
    %v800 = vpack.c.b16 %v799, %v798
    %v803 = vsel %vm638, %v795, 0
    %805 = vmatpush.bf16.msra.mxu0 0
    %806 = vmatpush.bf16.msra.mxu0 0
    %807 = vmatpush.bf16.msra.mxu0 0
    %808 = vmatpush.bf16.msra.mxu0 0
    %809 = vmatpush.bf16.msra.mxu0 0
    %810 = vmatpush.bf16.msra.mxu0 0
    %811 = vmatpush.bf16.msra.mxu0 0
    %812 = vmatpush.bf16.msra.mxu0 %v800
    %813 = vmatmul.bf16.gmra.mxu0 %v803
    %v814 = vpop.f32.mrf.mxu0
    %v815 = vadd.f32 0.0, %v814
    %v816 = vpop.f32.mrf.mxu0
    %v817 = vadd.f32 0.0, %v816
    %818 = vdwg.mxu0
    %v821 = vunpack.c.l.b16 %v733
    %v822 = vunpack.c.l.b16 %v734
    %v823 = vpack.c.b16 %v822, %v821
    %v826 = vunpack.c.l.b16 %v513
    %v827 = vunpack.c.l.b16 %v514
    %v828 = vpack.c.b16 %v827, %v826
    %v831 = vsel %vm638, %v823, 0
    %833 = vmatpush.bf16.msra.mxu0 0
    %834 = vmatpush.bf16.msra.mxu0 0
    %835 = vmatpush.bf16.msra.mxu0 0
    %836 = vmatpush.bf16.msra.mxu0 0
    %837 = vmatpush.bf16.msra.mxu0 0
    %838 = vmatpush.bf16.msra.mxu0 0
    %839 = vmatpush.bf16.msra.mxu0 0
    %840 = vmatpush.bf16.msra.mxu0 %v828
    %841 = vmatmul.bf16.gmra.mxu0 %v831
    %v842 = vpop.f32.mrf.mxu0
    %v843 = vadd.f32 0.0, %v842
    %v844 = vpop.f32.mrf.mxu0
    %v845 = vadd.f32 0.0, %v844
    %846 = vdwg.mxu0
    %v847 = vld [vmem:[%s8] sm:$0x1]
    %v848 = vpack.c.bf16 %v761, %v759
    %v849 = vld [vmem:[%s7] sm:$0xf]
    %v850 = vpack.c.bf16 %v789, %v787
    %s851 = scalar_lea.vmem %s7, 4
    %v852 = vld [vmem:[%s851] sm:$0xf]
    %v854 = vsel %vm527, %v850, 0
    %vm856 = vcmask 1043456
    %v858 = vsel %vm856, %v852, 0
    %860 = vmatpush.bf16.msra.mxu0 0
    %861 = vmatpush.bf16.msra.mxu0 0
    %862 = vmatpush.bf16.msra.mxu0 0
    %863 = vmatpush.bf16.msra.mxu0 0
    %864 = vmatpush.bf16.msra.mxu0 0
    %865 = vmatpush.bf16.msra.mxu0 0
    %866 = vmatpush.bf16.msra.mxu0 0
    %867 = vmatpush.bf16.msra.mxu0 %v858
    %868 = vmatmul.bf16.gmra.mxu0 %v854
    %v869 = vpop.f32.mrf.mxu0
    %v870 = vadd.f32 0.0, %v869
    %v871 = vpop.f32.mrf.mxu0
    %v872 = vadd.f32 0.0, %v871
    %873 = vdwg.mxu0
    %v875 = vsel %vm527, %v848, 0
    %v878 = vsel %vm856, %v849, 0
    %880 = vmatpush.bf16.msra.mxu0 0
    %881 = vmatpush.bf16.msra.mxu0 0
    %882 = vmatpush.bf16.msra.mxu0 0
    %883 = vmatpush.bf16.msra.mxu0 0
    %884 = vmatpush.bf16.msra.mxu0 0
    %885 = vmatpush.bf16.msra.mxu0 0
    %886 = vmatpush.bf16.msra.mxu0 0
    %887 = vmatpush.bf16.msra.mxu0 %v878
    %888 = vmatmul.bf16.gmra.mxu0 %v875
    %v889 = vpop.f32.mrf.mxu0
    %v890 = vadd.f32 %v870, %v889
    %v891 = vpop.f32.mrf.mxu0
    %v892 = vadd.f32 %v872, %v891
    %893 = vdwg.mxu0
    %v894 = vpack.c.bf16 %v817, %v815
    %s895 = scalar_lea.vmem %s7, 8
    %v896 = vld [vmem:[%s895] sm:$0xf]
    %v898 = vsel %vm527, %v894, 0
    %v901 = vsel %vm856, %v896, 0
    %903 = vmatpush.bf16.msra.mxu0 0
    %904 = vmatpush.bf16.msra.mxu0 0
    %905 = vmatpush.bf16.msra.mxu0 0
    %906 = vmatpush.bf16.msra.mxu0 0
    %907 = vmatpush.bf16.msra.mxu0 0
    %908 = vmatpush.bf16.msra.mxu0 0
    %909 = vmatpush.bf16.msra.mxu0 0
    %910 = vmatpush.bf16.msra.mxu0 %v901
    %911 = vmatmul.bf16.gmra.mxu0 %v898
    %v912 = vpop.f32.mrf.mxu0
    %v913 = vadd.f32 0.0, %v912
    %v914 = vpop.f32.mrf.mxu0
    %v915 = vadd.f32 0.0, %v914
    %916 = vdwg.mxu0
    %v917 = vadd.f32 %v890, %v913
    %v918 = vadd.f32 %v892, %v915
    %v919 = vpack.c.bf16 %v845, %v843
    %s920 = scalar_lea.vmem %s7, 12
    %v921 = vld [vmem:[%s920] sm:$0xf]
    %v923 = vsel %vm527, %v919, 0
    %v926 = vsel %vm856, %v921, 0
    %928 = vmatpush.bf16.msra.mxu0 0
    %929 = vmatpush.bf16.msra.mxu0 0
    %930 = vmatpush.bf16.msra.mxu0 0
    %931 = vmatpush.bf16.msra.mxu0 0
    %932 = vmatpush.bf16.msra.mxu0 0
    %933 = vmatpush.bf16.msra.mxu0 0
    %934 = vmatpush.bf16.msra.mxu0 0
    %935 = vmatpush.bf16.msra.mxu0 %v926
    %936 = vmatmul.bf16.gmra.mxu0 %v923
    %v937 = vpop.f32.mrf.mxu0
    %v938 = vadd.f32 0.0, %v937
    %v939 = vpop.f32.mrf.mxu0
    %v940 = vadd.f32 0.0, %v939
    %941 = vdwg.mxu0
    %v942 = vadd.f32 %v917, %v938
    %v943 = vadd.f32 %v918, %v940
    %v945 = vperm.slane %v847, 0
    %v947 = vadd.f32 %v945, %v942
    %v948 = vadd.f32 %v945, %v943
    %v949 = vadd.f32 %v52, %v947
    %v950 = vadd.f32 %v53, %v948
    %v951 = vld [vmem:[%s9] sm:$0x1]
    %v952 = vld [vmem:[%s10] sm:$0x1]
    %v953 = vsel %vm56, %v949, 0.0
    %954 = vadd.xlane.f32.xlu0 %v953
    %v955 = vpop.xlane.xlu0 %954
    %v956 = vsel %vm56, %v950, 0.0
    %957 = vadd.xlane.f32.xlu0 %v956
    %v958 = vpop.xlane.xlu0 %957
    %v959 = vmul.f32 %v955, %v69
    %v960 = vmul.f32 %v958, %v69
    %v961 = vsub.f32 %v949, %v959
    %v962 = vsub.f32 %v950, %v960
    %v963 = vmul.f32 %v961, %v961
    %v964 = vmul.f32 %v962, %v962
    %v965 = vsel %vm56, %v963, 0.0
    %966 = vadd.xlane.f32.xlu0 %v965
    %v967 = vpop.xlane.xlu0 %966
    %v968 = vsel %vm56, %v964, 0.0
    %969 = vadd.xlane.f32.xlu0 %v968
    %v970 = vpop.xlane.xlu0 %969
    %v971 = vmul.f32 %v967, %v69
    %v972 = vmul.f32 %v970, %v69
    %v973 = vadd.f32 %v971, 1e-05
    %v974 = vadd.f32 %v972, 1e-05
    %v975 = vrsqrt.pop %v973
    %v976 = vmul.f32 %v975, %v973
    %v977 = vmul.f32 %v976, %v975
    %v978 = vmul.f32 0.5, %v977
    %v979 = vsub.f32 1.5, %v978
    %v980 = vmul.f32 %v975, %v979
    %vm981 = vweird.f32 %v973
    %vm982 = vweird.f32 %v975
    %vm983 = vmor %vm981, %vm982
    %v984 = vsel %vm983, %v975, %v980
    %v985 = vrsqrt.pop %v974
    %v986 = vmul.f32 %v985, %v974
    %v987 = vmul.f32 %v986, %v985
    %v988 = vmul.f32 0.5, %v987
    %v989 = vsub.f32 1.5, %v988
    %v990 = vmul.f32 %v985, %v989
    %vm991 = vweird.f32 %v974
    %vm992 = vweird.f32 %v985
    %vm993 = vmor %vm991, %vm992
    %v994 = vsel %vm993, %v985, %v990
    %v995 = vmul.f32 %v961, %v984
    %v996 = vmul.f32 %v962, %v994
    %v998 = vperm.slane %v951, 0
    %v1000 = vmul.f32 %v995, %v998
    %v1001 = vmul.f32 %v996, %v998
    %v1003 = vperm.slane %v952, 0
    %v1005 = vadd.f32 %v1000, %v1003
    %v1006 = vadd.f32 %v1001, %v1003
    %v1007 = vpack.c.bf16 %v1006, %v1005
    %v1008 = vld [vmem:[%s11] sm:$0xf]
    %v1009 = vld [vmem:[%s11 + $0x4] sm:$0xf]
    %v1010 = vld [vmem:[%s11 + $0x8] sm:$0xf]
    %v1011 = vld [vmem:[%s11 + $0xc] sm:$0xf]
    %v1012 = vld [vmem:[%s12] sm:$0x1]
    %v1014 = vperm.slane %v1012, 0
    %v1020 = vunpack.c.l.b16 %v1008
    %v1021 = vunpack.c.l.b16 %v1009
    %v1022 = vunpack.c.l.b16 %v1010
    %v1023 = vunpack.c.l.b16 %v1011
    %v1024 = vpack.c.b16 %v1021, %v1020
    %v1025 = vpack.c.b16 %v1023, %v1022
    %v1029 = vsel %vm56, %v1007, 0
    %1031 = vmatpush.bf16.msra.mxu0 0
    %1032 = vmatpush.bf16.msra.mxu0 0
    %1033 = vmatpush.bf16.msra.mxu0 0
    %1034 = vmatpush.bf16.msra.mxu0 0
    %1035 = vmatpush.bf16.msra.mxu0 0
    %1036 = vmatpush.bf16.msra.mxu0 0
    %1037 = vmatpush.bf16.msra.mxu0 %v1025
    %1038 = vmatpush.bf16.msra.mxu0 %v1024
    %1039 = vmatmul.bf16.gmra.mxu0 %v1029
    %v1040 = vpop.f32.mrf.mxu0
    %v1041 = vadd.f32 %v1014, %v1040
    %v1042 = vpop.f32.mrf.mxu0
    %v1043 = vadd.f32 %v1014, %v1042
    %1044 = vdwg.mxu0
    %v1045 = vmul.f32 %v1041, 0.5
    %v1046 = vmul.f32 %v1043, 0.5
    %v1047 = vmul.f32 %v1041, 0.70710677
    %v1048 = vmul.f32 %v1043, 0.70710677
    %v1049 = vmul.f32 %v1047, %v1047
    %v1050 = vmin.f32 16.0, %v1049
    %v1051 = vmul.f32 %v1050, 2.1237322e-06
    %v1052 = vadd.f32 %v1051, 0.00028619796
    %v1053 = vmul.f32 %v1050, %v1052
    %v1054 = vadd.f32 %v1053, 0.0036580483
    %v1055 = vmul.f32 %v1050, %v1054
    %v1056 = vadd.f32 %v1055, 0.05243302
    %v1057 = vmul.f32 %v1050, %v1056
    %v1058 = vadd.f32 %v1057, 0.18741608
    %v1059 = vmul.f32 %v1050, %v1058
    %v1060 = vadd.f32 %v1059, 1.1283791
    %v1061 = vmul.f32 %v1047, %v1060
    %v1062 = vmul.f32 %v1050, 3.8918573e-05
    %v1063 = vadd.f32 %v1062, 0.001143296
    %v1064 = vmul.f32 %v1050, %v1063
    %v1065 = vadd.f32 %v1064, 0.014752088
    %v1066 = vmul.f32 %v1050, %v1065
    %v1067 = vadd.f32 %v1066, 0.112945676
    %v1068 = vmul.f32 %v1050, %v1067
    %v1069 = vadd.f32 %v1068, 0.4994258
    %v1070 = vmul.f32 %v1050, %v1069
    %v1071 = vadd.f32 %v1070, 1.0
    %v1072 = vrcp.pop %v1071
    %v1073 = vmul.f32 %v1071, %v1072
    %v1074 = vsub.f32 1.0, %v1073
    %v1075 = vmul.f32 %v1072, %v1074
    %v1076 = vadd.f32 %v1072, %v1075
    %vm1077 = vweird.f32 %v1071
    %vm1078 = vweird.f32 %v1072
    %vm1079 = vmor %vm1077, %vm1078
    %v1080 = vsel %vm1079, %v1072, %v1076
    %v1081 = vand.u32 2147483647, %v1071
    %vm1082 = vcmp.eq.f32.partialorder %v1081, 8.507059e+37
    %v1083 = vand.u32 %v1071, 2147483648
    %v1084 = vor.u32 1.1754944e-38, %v1083
    %v1085 = vsel %vm1082, %v1084, %v1080
    %v1086 = vmul.f32 %v1061, %v1085
    %v1087 = vmin.f32 %v1086, 1.0
    %v1088 = vmax.f32 %v1087, -1.0
    %v1089 = vmul.f32 %v1048, %v1048
    %v1090 = vmin.f32 16.0, %v1089
    %v1091 = vmul.f32 %v1090, 2.1237322e-06
    %v1092 = vadd.f32 %v1091, 0.00028619796
    %v1093 = vmul.f32 %v1090, %v1092
    %v1094 = vadd.f32 %v1093, 0.0036580483
    %v1095 = vmul.f32 %v1090, %v1094
    %v1096 = vadd.f32 %v1095, 0.05243302
    %v1097 = vmul.f32 %v1090, %v1096
    %v1098 = vadd.f32 %v1097, 0.18741608
    %v1099 = vmul.f32 %v1090, %v1098
    %v1100 = vadd.f32 %v1099, 1.1283791
    %v1101 = vmul.f32 %v1048, %v1100
    %v1102 = vmul.f32 %v1090, 3.8918573e-05
    %v1103 = vadd.f32 %v1102, 0.001143296
    %v1104 = vmul.f32 %v1090, %v1103
    %v1105 = vadd.f32 %v1104, 0.014752088
    %v1106 = vmul.f32 %v1090, %v1105
    %v1107 = vadd.f32 %v1106, 0.112945676
    %v1108 = vmul.f32 %v1090, %v1107
    %v1109 = vadd.f32 %v1108, 0.4994258
    %v1110 = vmul.f32 %v1090, %v1109
    %v1111 = vadd.f32 %v1110, 1.0
    %v1112 = vrcp.pop %v1111
    %v1113 = vmul.f32 %v1111, %v1112
    %v1114 = vsub.f32 1.0, %v1113
    %v1115 = vmul.f32 %v1112, %v1114
    %v1116 = vadd.f32 %v1112, %v1115
    %vm1117 = vweird.f32 %v1111
    %vm1118 = vweird.f32 %v1112
    %vm1119 = vmor %vm1117, %vm1118
    %v1120 = vsel %vm1119, %v1112, %v1116
    %v1121 = vand.u32 2147483647, %v1111
    %vm1122 = vcmp.eq.f32.partialorder %v1121, 8.507059e+37
    %v1123 = vand.u32 %v1111, 2147483648
    %v1124 = vor.u32 1.1754944e-38, %v1123
    %v1125 = vsel %vm1122, %v1124, %v1120
    %v1126 = vmul.f32 %v1101, %v1125
    %v1127 = vmin.f32 %v1126, 1.0
    %v1128 = vmax.f32 %v1127, -1.0
    %v1129 = vadd.f32 %v1088, 1.0
    %v1130 = vadd.f32 %v1128, 1.0
    %v1131 = vmul.f32 %v1045, %v1129
    %v1132 = vmul.f32 %v1046, %v1130
    %v1133 = vpack.c.bf16 %v1132, %v1131
    %v1134 = vld [vmem:[%s13] sm:$0xf]
    %v1135 = vld [vmem:[%s13 + $0x4] sm:$0xf]
    %v1136 = vld [vmem:[%s13 + $0x8] sm:$0xf]
    %v1137 = vld [vmem:[%s13 + $0xc] sm:$0xf]
    %v1138 = vld [vmem:[%s13 + $0x10] sm:$0xf]
    %v1139 = vld [vmem:[%s13 + $0x14] sm:$0xf]
    %v1140 = vld [vmem:[%s13 + $0x18] sm:$0xf]
    %v1141 = vld [vmem:[%s13 + $0x1c] sm:$0xf]
    %v1142 = vld [vmem:[%s13 + $0x20] sm:$0xf]
    %v1143 = vld [vmem:[%s13 + $0x24] sm:$0xf]
    %v1144 = vld [vmem:[%s13 + $0x28] sm:$0xf]
    %v1145 = vld [vmem:[%s13 + $0x2c] sm:$0xf]
    %v1146 = vld [vmem:[%s13 + $0x30] sm:$0xf]
    %v1147 = vld [vmem:[%s13 + $0x34] sm:$0xf]
    %v1148 = vld [vmem:[%s13 + $0x38] sm:$0xf]
    %v1149 = vld [vmem:[%s13 + $0x3c] sm:$0xf]
    %v1150 = vld [vmem:[%s14] sm:$0x1]
    %v1152 = vperm.slane %v1150, 0
    %v1170 = vunpack.c.l.b16 %v1134
    %v1171 = vunpack.c.l.b16 %v1135
    %v1172 = vunpack.c.l.b16 %v1136
    %v1173 = vunpack.c.l.b16 %v1137
    %v1174 = vunpack.c.l.b16 %v1138
    %v1175 = vunpack.c.l.b16 %v1139
    %v1176 = vunpack.c.l.b16 %v1140
    %v1177 = vunpack.c.l.b16 %v1141
    %v1178 = vunpack.c.l.b16 %v1142
    %v1179 = vunpack.c.l.b16 %v1143
    %v1180 = vunpack.c.l.b16 %v1144
    %v1181 = vunpack.c.l.b16 %v1145
    %v1182 = vunpack.c.l.b16 %v1146
    %v1183 = vunpack.c.l.b16 %v1147
    %v1184 = vunpack.c.l.b16 %v1148
    %v1185 = vunpack.c.l.b16 %v1149
    %v1186 = vpack.c.b16 %v1171, %v1170
    %v1187 = vpack.c.b16 %v1173, %v1172
    %v1188 = vpack.c.b16 %v1175, %v1174
    %v1189 = vpack.c.b16 %v1177, %v1176
    %v1190 = vpack.c.b16 %v1179, %v1178
    %v1191 = vpack.c.b16 %v1181, %v1180
    %v1192 = vpack.c.b16 %v1183, %v1182
    %v1193 = vpack.c.b16 %v1185, %v1184
    %1202 = vmatpush.bf16.msra.mxu0 %v1193
    %1203 = vmatpush.bf16.msra.mxu0 %v1192
    %1204 = vmatpush.bf16.msra.mxu0 %v1191
    %1205 = vmatpush.bf16.msra.mxu0 %v1190
    %1206 = vmatpush.bf16.msra.mxu0 %v1189
    %1207 = vmatpush.bf16.msra.mxu0 %v1188
    %1208 = vmatpush.bf16.msra.mxu0 %v1187
    %1209 = vmatpush.bf16.msra.mxu0 %v1186
    %1210 = vmatmul.bf16.gmra.mxu0 %v1133
    %v1211 = vpop.f32.mrf.mxu0
    %v1212 = vadd.f32 %v1152, %v1211
    %v1213 = vpop.f32.mrf.mxu0
    %v1214 = vadd.f32 %v1152, %v1213
    %1215 = vdwg.mxu0
    %v1216 = vadd.f32 %v949, %v1212
    %v1217 = vadd.f32 %v950, %v1214
    %1218 = vst.msk [vmem:[#allocation2] sm:$0xff] %vm56, %v1216
    %1219 = vst.msk [vmem:[#allocation2 + $0x8] sm:$0xff] %vm56, %v1217
    // Predicated region
    $region62: #{tpu_custom_call.1} parent=1 // pred_check
      _
    $region63: #{tpu_custom_call.1} parent=1 // pred_check_branch
      %1221 = sbr.rel (0) target = $region65
    $region64: #{tpu_custom_call.1} parent=1 // pred_region
      %1223 = vsyncadd [#allocation3], 0
      %s1224 = sshll.u32 [#allocation2], 4
      %s1225 = int_to_ptr.vmem [resolvable:$true] %s1224
      %s1226 = sshll.u32 %s15, 4
      %s1227 = int_to_ptr.hbm [resolvable:$true] %s1226
      %1232 = dma.vmem_to_hbm [thread:$0]  %s1225, 256, %s1227, [#allocation3], 128, 128, 8
    $region65: #{tpu_custom_call.1} parent=1 // pred_fallthru
      _
    // Predicated region
    $region66: #{tpu_custom_call.1} parent=1 // pred_check
      _
    $region67: #{tpu_custom_call.1} parent=1 // pred_check_branch
      %1234 = sbr.rel (0) target = $region69
    $region68: #{tpu_custom_call.1} parent=1 // pred_region
      %1236 = dma.done [#allocation3], 256
    $region69: #{tpu_custom_call.1} parent=1 // pred_fallthru
      _
    %1237 = vsyncpa [#allocation3], 1

</llo_original>
